<compile_context>
chip_gen: v5e
topology: v5e:2x2
jax: 0.10.0
libtpu: 0.0.40
codegen_flags: <defaults>
</compile_context>

<pallas_src>
import functools

import jax
import jax.numpy as jnp
import numpy as np
from jax.experimental import pallas as pl
from jax.experimental.pallas import tpu as pltpu


def _round_up(x, m):
    return (x + m - 1) // m * m


def _gelu_exact(x):
    # PyTorch default GELU (approximate='none'): 0.5*x*(1+erf(x/sqrt(2)))
    return 0.5 * x * (1.0 + jax.lax.erf(x * (1.0 / jnp.sqrt(2.0))))


def _vmem_capacity_bytes():
    try:
        info = pltpu.get_tpu_info()
        cap = int(getattr(info, "vmem_capacity_bytes", 0) or 0)
        if cap > 0:
            return cap
    except Exception:
        pass
    return 64 * 2 ** 20  # conservative fallback (v7x per-core VMEM)


def conv_block_kernel(*refs, kf, ch, use_linear_skip, fold_joints, mm_dtype):
    x_ref, w_dw_ref, w_pw_ref, b_ref, bn_s_ref, bn_b_ref = refs[:6]
    rest = refs[6:]
    if use_linear_skip:
        w_lin_ref, b_lin_ref, bns_s_ref, bns_b_ref = rest[:4]
        rest = rest[4:]
    (out_ref,) = rest

    halo = kf - 1
    tf = out_ref.shape[0]
    n_chunks = tf // ch

    @pl.loop(0, n_chunks)
    def _chunk(c):
        base = pl.multiple_of(c * ch, ch)

        # ---- depthwise (kf,1) temporal conv: taps unrolled, accumulator stays in vregs ----
        w_dw = w_dw_ref[...]                              # (kf, 1, Lin) or (kf, 1, 1, E)
        acc = x_ref[pl.ds(base, ch)] * w_dw[0]
        for k in range(1, kf):
            acc = acc + x_ref[pl.ds(base + k, ch)] * w_dw[k]
        xr = x_ref[pl.ds(base + halo, ch)]                # un-padded x -> residual input

        if fold_joints:
            lhs, res_in = acc, xr                         # (ch, J*E)
        else:
            jp, e = x_ref.shape[1], x_ref.shape[2]
            lhs = acc.reshape(ch * jp, e)                 # (ch*J, E)
            res_in = xr.reshape(ch * jp, e)

        # ---- pointwise 1x1 conv (+ folded dw/pw bias), GELU, BatchNorm (inference) ----
        y = jax.lax.dot_general(lhs.astype(mm_dtype), w_pw_ref[...],
                                (((1,), (0,)), ((), ())),
                                preferred_element_type=jnp.float32)
        y = y + b_ref[...]
        y = _gelu_exact(y)
        y = y * bn_s_ref[...] + bn_b_ref[...]

        # ---- residual branch ----
        if use_linear_skip:                               # Linear + GELU + BN skip
            r = jax.lax.dot_general(res_in.astype(mm_dtype), w_lin_ref[...],
                                    (((1,), (0,)), ((), ())),
                                    preferred_element_type=jnp.float32)
            r = r + b_lin_ref[...]
            r = _gelu_exact(r)
            r = r * bns_s_ref[...] + bns_b_ref[...]
        else:
            r = res_in.astype(jnp.float32)                # identity skip (in == out channels)

        val = y + r
        if fold_joints:
            out_ref[pl.ds(base, ch)] = val                # (ch, J*O), lane-dense store
        else:
            out_ref[pl.ds(base, ch)] = val.reshape(ch, x_ref.shape[1], out_ref.shape[-1])


def conv_block_forward(x_nchw, params, *, kernel_frame, frame_tile=None,
                       fold_joints=None, use_bf16_matmul=False):
    """x_nchw: (B, in_channels, frames, joints) f32 -> (B, out_channels, frames, joints)."""
    B, E, F, J = x_nchw.shape
    O = params["w_pw"].shape[1]
    kf = int(kernel_frame)
    halo = kf - 1
    if F < kf:
        raise ValueError("ReflectionPad2d(kf-1) requires frames >= kernel_frame")
    use_linear_skip = (E != O)       # PyTorch's `no_diff_c` flag is True when channels differ
    eps = 1e-3
    f32 = jnp.float32
    mm_dtype = jnp.bfloat16 if use_bf16_matmul else jnp.float32

    # TODO(synk): Dropout(p=0.01) is eval-mode identity; BatchNorm2d uses running statistics
    # (inference mode), not batch statistics.

    Jp = _round_up(J, 8)             # joints on the sublane axis
    JE, JO = Jp * E, Jp * O
    if fold_joints is None:
        fold_joints = (Jp * max(E, O) <= 512)    # small channels: fold joints onto lanes

    # ---- fold BN (inference) into scale/shift; fold the depthwise bias through the pointwise ----
    bn_scale = (params["bn_gamma"] / jnp.sqrt(params["bn_var"] + eps)).astype(f32)
    bn_shift = (params["bn_beta"] - params["bn_mean"] * bn_scale).astype(f32)
    b_eff = (params["b_dw"] @ params["w_pw"] + params["b_pw"]).astype(f32)

    if fold_joints:
        w_dw_k = jnp.tile(params["w_dw"], (1, Jp)).reshape(kf, 1, JE).astype(f32)
        w_pw_k = jnp.kron(jnp.eye(Jp, dtype=f32), params["w_pw"]).astype(mm_dtype)
        b_k = jnp.tile(b_eff, Jp).reshape(1, JO)
        bn_s_k = jnp.tile(bn_scale, Jp).reshape(1, JO)
        bn_b_k = jnp.tile(bn_shift, Jp).reshape(1, JO)
        in_lanes, frame_rows = JE, 1
    else:
        w_dw_k = params["w_dw"].reshape(kf, 1, 1, E).astype(f32)
        w_pw_k = params["w_pw"].astype(mm_dtype)
        b_k = b_eff.reshape(1, O)
        bn_s_k = bn_scale.reshape(1, O)
        bn_b_k = bn_shift.reshape(1, O)
        in_lanes, frame_rows = E, Jp

    args = [None, w_dw_k, w_pw_k, b_k, bn_s_k, bn_b_k]
    if use_linear_skip:
        bns_scale = (params["bns_gamma"] / jnp.sqrt(params["bns_var"] + eps)).astype(f32)
        bns_shift = (params["bns_beta"] - params["bns_mean"] * bns_scale).astype(f32)
        if fold_joints:
            w_lin_k = jnp.kron(jnp.eye(Jp, dtype=f32), params["w_lin"]).astype(mm_dtype)
            b_lin_k = jnp.tile(params["b_lin"].astype(f32), Jp).reshape(1, JO)
            bns_s_k = jnp.tile(bns_scale, Jp).reshape(1, JO)
            bns_b_k = jnp.tile(bns_shift, Jp).reshape(1, JO)
        else:
            w_lin_k = params["w_lin"].astype(mm_dtype)
            b_lin_k = params["b_lin"].reshape(1, O).astype(f32)
            bns_s_k = bns_scale.reshape(1, O)
            bns_b_k = bns_shift.reshape(1, O)
        args += [w_lin_k, b_lin_k, bns_s_k, bns_b_k]

    # ---- generation-aware tiling (v5e/v6e: 128 MiB VMEM, v7x: 64 MiB) ----
    lane = 128
    cap = _vmem_capacity_bytes()
    budget = min(int(0.45 * cap), 96 * 2 ** 20)
    tf_cap = 512 if cap >= 96 * 2 ** 20 else 256

    const_bytes = sum(
        2 * _round_up(int(np.prod(a.shape[:-1])), 8) * _round_up(a.shape[-1], lane)
        * a.dtype.itemsize for a in args[1:])

    def pipeline_bytes(tf):
        if fold_joints:
            inb = _round_up(tf + halo, 8) * _round_up(JE, lane) * 4
            outb = _round_up(tf, 8) * _round_up(JO, lane) * 4
        else:
            inb = (tf + halo) * Jp * _round_up(E, lane) * 4
            outb = tf * Jp * _round_up(O, lane) * 4
        return 2 * (inb + outb)          # double-buffered input window + output block

    if frame_tile is None:
        TF = max(8, min(tf_cap, _round_up(F, 8)))
        while TF > 8 and pipeline_bytes(TF) + const_bytes > budget:
            TF -= 8
    else:
        TF = int(frame_tile)
        if TF < 8 or TF % 8 != 0:
            raise ValueError("frame_tile must be a positive multiple of 8")
    F_pad = _round_up(F, TF)
    nF = F_pad // TF

    # in-kernel frame-chunk size: keep the depthwise accumulator ~<= 32 KiB of vregs
    acc_budget = 32 * 1024
    frame_bytes = frame_rows * _round_up(in_lanes, lane) * 4
    ch_max = 1
    while ch_max * 2 * frame_bytes <= acc_budget and ch_max * 2 <= TF:
        ch_max *= 2
    cands = [d for d in range(min(ch_max, TF), 0, -1) if TF % d == 0]
    CH = next((d for d in cands if d % 8 == 0), cands[0])

    vmem_need = pipeline_bytes(TF) + const_bytes
    vmem_limit = max(vmem_need + (4 << 20), 32 << 20)
    vmem_limit = int(min(vmem_limit, int(0.7 * cap)))
    vmem_limit = max(vmem_limit, vmem_need + (2 << 20))

    # ---- channels-last, joint pad, reflection front pad, zero tail, overlapping frame windows ----
    x = jnp.transpose(x_nchw, (0, 2, 3, 1)).astype(f32)              # (B, F, J, E)
    x = jnp.pad(x, ((0, 0), (0, 0), (0, Jp - J), (0, 0)))
    if halo > 0:
        front = jnp.flip(x[:, 1:halo + 1], axis=1)                   # ReflectionPad2d((0,0,kf-1,0))
        xp = jnp.concatenate([front, x], axis=1)
    else:
        xp = x
    xp = jnp.pad(xp, ((0, 0), (0, F_pad - F), (0, 0), (0, 0)))       # causal conv: tail unused
    idx = jnp.arange(nF)[:, None] * TF + jnp.arange(TF + halo)[None, :]
    xw = xp[:, idx]                                                  # (B, nF, TF+halo, Jp, E)
    if fold_joints:
        xw = xw.reshape(B, nF, TF + halo, JE)
    args[0] = xw

    # ---- BlockSpecs / grid ----
    if fold_joints:
        x_spec = pl.BlockSpec((None, None, TF + halo, JE), lambda b, f: (b, f, 0, 0))
        out_spec = pl.BlockSpec((None, TF, JO), lambda b, f: (b, f, 0))
        out_shape = jax.ShapeDtypeStruct((B, F_pad, JO), f32)
    else:
        x_spec = pl.BlockSpec((None, None, TF + halo, Jp, E), lambda b, f: (b, f, 0, 0, 0))
        out_spec = pl.BlockSpec((None, TF, Jp, O), lambda b, f: (b, f, 0, 0))
        out_shape = jax.ShapeDtypeStruct((B, F_pad, Jp, O), f32)
    in_specs = [x_spec] + [pl.BlockSpec(a.shape, lambda b, f, n=a.ndim: (0,) * n)
                           for a in args[1:]]

    kernel = functools.partial(conv_block_kernel, kf=kf, ch=CH,
                               use_linear_skip=use_linear_skip,
                               fold_joints=fold_joints, mm_dtype=mm_dtype)
    out = pl.pallas_call(
        kernel,
        out_shape=out_shape,
        grid=(B, nF),
        in_specs=in_specs,
        out_specs=out_spec,
        compiler_params=pltpu.CompilerParams(
            dimension_semantics=("parallel", "parallel"),
            vmem_limit_bytes=vmem_limit),
    )(*args)

    if fold_joints:
        out = out.reshape(B, F_pad, Jp, O)
    out = out[:, :F, :J, :]                                          # drop frame/joint padding
    return jnp.transpose(out, (0, 3, 1, 2))                          # back to NCHW (B, O, F, J)


# ---------------- pure-JAX reference (NCHW, real convs) ----------------
def reference_forward(x, p, *, kernel_frame):
    B, E, F, J = x.shape
    O = p["w_pw"].shape[1]
    eps = 1e-3
    xp = jnp.pad(x, ((0, 0), (0, 0), (kernel_frame - 1, 0), (0, 0)), mode="reflect")
    w_dw = jnp.transpose(p["w_dw"], (1, 0))[:, None, :, None]        # (E,1,kf,1)
    dw = jax.lax.conv_general_dilated(
        xp, w_dw, (1, 1), "VALID",
        dimension_numbers=("NCHW", "OIHW", "NCHW"), feature_group_count=E)
    dw = dw + p["b_dw"][None, :, None, None]
    w_pw = jnp.transpose(p["w_pw"], (1, 0))[:, :, None, None]        # (O,E,1,1)
    y = jax.lax.conv_general_dilated(
        dw, w_pw, (1, 1), "VALID", dimension_numbers=("NCHW", "OIHW", "NCHW"))
    y = y + p["b_pw"][None, :, None, None]
    y = _gelu_exact(y)
    y = ((y - p["bn_mean"][None, :, None, None])
         / jnp.sqrt(p["bn_var"][None, :, None, None] + eps)
         * p["bn_gamma"][None, :, None, None] + p["bn_beta"][None, :, None, None])
    if E != O:
        r = jnp.einsum("befj,eo->bofj", x, p["w_lin"]) + p["b_lin"][None, :, None, None]
        r = _gelu_exact(r)
        r = ((r - p["bns_mean"][None, :, None, None])
             / jnp.sqrt(p["bns_var"][None, :, None, None] + eps)
             * p["bns_gamma"][None, :, None, None] + p["bns_beta"][None, :, None, None])
    else:
        r = x
    return y + r


def init_params(key, in_channels, out_channels, kernel_frame):
    ks = jax.random.split(key, 12)
    E, O, kf = in_channels, out_channels, kernel_frame
    p = {
        "w_dw": 0.3 * jax.random.normal(ks[0], (kf, E), jnp.float32),
        "b_dw": 0.1 * jax.random.normal(ks[1], (E,), jnp.float32),
        "w_pw": 0.3 * jax.random.normal(ks[2], (E, O), jnp.float32),
        "b_pw": 0.1 * jax.random.normal(ks[3], (O,), jnp.float32),
        "bn_gamma": 1.0 + 0.1 * jax.random.normal(ks[4], (O,), jnp.float32),
        "bn_beta": 0.1 * jax.random.normal(ks[5], (O,), jnp.float32),
        "bn_mean": 0.1 * jax.random.normal(ks[6], (O,), jnp.float32),
        "bn_var": jax.random.uniform(ks[7], (O,), jnp.float32, 0.5, 1.5),
    }
    if E != O:
        p.update({
            "w_lin": 0.3 * jax.random.normal(ks[8], (E, O), jnp.float32),
            "b_lin": 0.1 * jax.random.normal(ks[9], (O,), jnp.float32),
            "bns_gamma": 1.0 + 0.1 * jax.random.normal(ks[10], (O,), jnp.float32),
            "bns_beta": 0.1 * jax.random.normal(ks[11], (O,), jnp.float32),
            "bns_mean": 0.1 * jax.random.normal(ks[4], (O,), jnp.float32),
            "bns_var": jax.random.uniform(ks[5], (O,), jnp.float32, 0.5, 1.5),
        })
    return p


if __name__ == "__main__":
    # Keep both kernel and reference f32 matmuls at full accuracy for the tight comparisons.
    jax.config.update("jax_default_matmul_precision", "highest")

    key = jax.random.PRNGKey(0)
    B, E, O, F, J, KF = 2, 4, 8, 16, 16, 7    # kernel_frame default is 31; small demo value

    # Case 1: in != out channels (Linear+GELU+BN skip), joint-folded lane-dense small-channel
    # path, frame_tile=8 -> two overlapping frame tiles (exercises reflection + window halo).
    kx, kp = jax.random.split(key)
    x = jax.random.normal(kx, (B, E, F, J), jnp.float32)
    params = init_params(kp, E, O, KF)
    out = jax.block_until_ready(conv_block_forward(x, params, kernel_frame=KF, frame_tile=8))
    assert out.shape == (B, O, F, J)
    ref = reference_forward(x, params, kernel_frame=KF)
    np.testing.assert_allclose(np.asarray(out), np.asarray(ref), rtol=5e-4, atol=5e-4)

    # Case 2: in == out channels (identity skip), single frame tile, joint-folded path.
    params2 = init_params(jax.random.PRNGKey(1), E, E, KF)
    out2 = jax.block_until_ready(conv_block_forward(x, params2, kernel_frame=KF))
    ref2 = reference_forward(x, params2, kernel_frame=KF)
    np.testing.assert_allclose(np.asarray(out2), np.asarray(ref2), rtol=5e-4, atol=5e-4)

    # Case 3: larger channels -> per-chunk VPU depthwise + MXU pointwise path; J=17 exercises
    # sublane padding, frame_tile=8 with CH<TF exercises the in-kernel chunk loop.
    E3, O3, J3 = 64, 128, 17
    x3 = jax.random.normal(jax.random.PRNGKey(2), (B, E3, F, J3), jnp.float32)
    params3 = init_params(jax.random.PRNGKey(3), E3, O3, KF)
    out3 = jax.block_until_ready(conv_block_forward(x3, params3, kernel_frame=KF, frame_tile=8))
    ref3 = reference_forward(x3, params3, kernel_frame=KF)
    np.testing.assert_allclose(np.asarray(out3), np.asarray(ref3), rtol=5e-4, atol=5e-4)

    # Case 4: large equal channels -> identity skip, auto frame tile.
    E4 = 128
    x4 = jax.random.normal(jax.random.PRNGKey(4), (B, E4, F, J), jnp.float32)
    params4 = init_params(jax.random.PRNGKey(5), E4, E4, KF)
    out4 = jax.block_until_ready(conv_block_forward(x4, params4, kernel_frame=KF))
    ref4 = reference_forward(x4, params4, kernel_frame=KF)
    np.testing.assert_allclose(np.asarray(out4), np.asarray(ref4), rtol=5e-4, atol=5e-4)

    # Case 5: bf16 matmul operands with f32 accumulation (looser tolerance: bf16 input rounding
    # introduces ~1e-2-scale absolute error; depthwise MAC and accumulation remain f32).
    out5 = jax.block_until_ready(conv_block_forward(x4, params4, kernel_frame=KF,
                                                    use_bf16_matmul=True))
    np.testing.assert_allclose(np.asarray(out5), np.asarray(ref4), rtol=1e-2, atol=1e-1)

    print("KERNEL_OK")
</pallas_src>

<mosaic_0001>
module attributes {stable_mosaic.version = 11 : i64} {
  func.func @conv_block_kernel(%arg0: i32, %arg1: i32, %arg2: memref<1x1x14x64xf32, #tpu.memory_space<vmem>>, %arg3: memref<7x1x64xf32, #tpu.memory_space<vmem>>, %arg4: memref<64x128xf32, #tpu.memory_space<vmem>>, %arg5: memref<1x128xf32, #tpu.memory_space<vmem>>, %arg6: memref<1x128xf32, #tpu.memory_space<vmem>>, %arg7: memref<1x128xf32, #tpu.memory_space<vmem>>, %arg8: memref<64x128xf32, #tpu.memory_space<vmem>>, %arg9: memref<1x128xf32, #tpu.memory_space<vmem>>, %arg10: memref<1x128xf32, #tpu.memory_space<vmem>>, %arg11: memref<1x128xf32, #tpu.memory_space<vmem>>, %arg12: memref<1x8x128xf32, #tpu.memory_space<vmem>>) attributes {dimension_semantics = [#tpu.dimension_semantics<parallel>, #tpu.dimension_semantics<parallel>], iteration_bounds = array<i64: 2, 2>, scalar_prefetch = 0 : i64, scratch_operands = 0 : i64, tpu.core_type = #tpu.core_type<tc>, window_params = [{transform_indices = @transform_0, window_bounds = array<i64: 1, 1, 14, 64>}, {pipeline_mode = #tpu.pipeline_mode<synchronous>, transform_indices = @transform_1, window_bounds = array<i64: 7, 1, 64>}, {pipeline_mode = #tpu.pipeline_mode<synchronous>, transform_indices = @transform_2, window_bounds = array<i64: 64, 128>}, {pipeline_mode = #tpu.pipeline_mode<synchronous>, transform_indices = @transform_3, window_bounds = array<i64: 1, 128>}, {pipeline_mode = #tpu.pipeline_mode<synchronous>, transform_indices = @transform_4, window_bounds = array<i64: 1, 128>}, {pipeline_mode = #tpu.pipeline_mode<synchronous>, transform_indices = @transform_5, window_bounds = array<i64: 1, 128>}, {pipeline_mode = #tpu.pipeline_mode<synchronous>, transform_indices = @transform_6, window_bounds = array<i64: 64, 128>}, {pipeline_mode = #tpu.pipeline_mode<synchronous>, transform_indices = @transform_7, window_bounds = array<i64: 1, 128>}, {pipeline_mode = #tpu.pipeline_mode<synchronous>, transform_indices = @transform_8, window_bounds = array<i64: 1, 128>}, {pipeline_mode = #tpu.pipeline_mode<synchronous>, transform_indices = @transform_9, window_bounds = array<i64: 1, 128>}, {transform_indices = @transform_10, window_bounds = array<i64: 1, 8, 128>}]} {
    %c0_i32 = arith.constant 0 : i32
    %c1_i32 = arith.constant 1 : i32
    %0 = arith.muli %c0_i32, %c1_i32 : i32
    %c0_i32_0 = arith.constant 0 : i32
    %1 = arith.addi %c0_i32_0, %0 : i32
    %c8_i32 = arith.constant 8 : i32
    %2 = arith.muli %1, %c8_i32 : i32
    %3 = tpu.assume_multiple %2, 8 : i32
    %c0 = arith.constant 0 : index
    %c0_1 = arith.constant 0 : index
    %c0_2 = arith.constant 0 : index
    %4 = vector.load %arg3[%c0, %c0_1, %c0_2] : memref<7x1x64xf32, #tpu.memory_space<vmem>>, vector<7x1x64xf32>
    %c0_3 = arith.constant 0 : index
    %c0_4 = arith.constant 0 : index
    %5 = arith.index_cast %3 : i32 to index
    %c0_5 = arith.constant 0 : index
    %6 = vector.load %arg2[%c0_3, %c0_4, %5, %c0_5] : memref<1x1x14x64xf32, #tpu.memory_space<vmem>>, vector<1x1x8x64xf32>
    %7 = vector.shape_cast %6 : vector<1x1x8x64xf32> to vector<8x64xf32>
    %8 = vector.extract_strided_slice %4 {offsets = [0, 0, 0], sizes = [1, 1, 64], strides = [1, 1, 1]} : vector<7x1x64xf32> to vector<1x1x64xf32>
    %9 = vector.shape_cast %8 : vector<1x1x64xf32> to vector<1x64xf32>
    %10 = vector.broadcast %9 : vector<1x64xf32> to vector<8x64xf32>
    %11 = arith.mulf %7, %10 : vector<8x64xf32>
    %c1_i32_6 = arith.constant 1 : i32
    %12 = arith.addi %3, %c1_i32_6 : i32
    %c0_7 = arith.constant 0 : index
    %c0_8 = arith.constant 0 : index
    %13 = arith.index_cast %12 : i32 to index
    %c0_9 = arith.constant 0 : index
    %14 = vector.load %arg2[%c0_7, %c0_8, %13, %c0_9] : memref<1x1x14x64xf32, #tpu.memory_space<vmem>>, vector<1x1x8x64xf32>
    %15 = vector.shape_cast %14 : vector<1x1x8x64xf32> to vector<8x64xf32>
    %16 = vector.extract_strided_slice %4 {offsets = [1, 0, 0], sizes = [1, 1, 64], strides = [1, 1, 1]} : vector<7x1x64xf32> to vector<1x1x64xf32>
    %17 = vector.shape_cast %16 : vector<1x1x64xf32> to vector<1x64xf32>
    %18 = vector.broadcast %17 : vector<1x64xf32> to vector<8x64xf32>
    %19 = arith.mulf %15, %18 : vector<8x64xf32>
    %20 = arith.addf %11, %19 : vector<8x64xf32>
    %c2_i32 = arith.constant 2 : i32
    %21 = arith.addi %3, %c2_i32 : i32
    %c0_10 = arith.constant 0 : index
    %c0_11 = arith.constant 0 : index
    %22 = arith.index_cast %21 : i32 to index
    %c0_12 = arith.constant 0 : index
    %23 = vector.load %arg2[%c0_10, %c0_11, %22, %c0_12] : memref<1x1x14x64xf32, #tpu.memory_space<vmem>>, vector<1x1x8x64xf32>
    %24 = vector.shape_cast %23 : vector<1x1x8x64xf32> to vector<8x64xf32>
    %25 = vector.extract_strided_slice %4 {offsets = [2, 0, 0], sizes = [1, 1, 64], strides = [1, 1, 1]} : vector<7x1x64xf32> to vector<1x1x64xf32>
    %26 = vector.shape_cast %25 : vector<1x1x64xf32> to vector<1x64xf32>
    %27 = vector.broadcast %26 : vector<1x64xf32> to vector<8x64xf32>
    %28 = arith.mulf %24, %27 : vector<8x64xf32>
    %29 = arith.addf %20, %28 : vector<8x64xf32>
    %c3_i32 = arith.constant 3 : i32
    %30 = arith.addi %3, %c3_i32 : i32
    %c0_13 = arith.constant 0 : index
    %c0_14 = arith.constant 0 : index
    %31 = arith.index_cast %30 : i32 to index
    %c0_15 = arith.constant 0 : index
    %32 = vector.load %arg2[%c0_13, %c0_14, %31, %c0_15] : memref<1x1x14x64xf32, #tpu.memory_space<vmem>>, vector<1x1x8x64xf32>
    %33 = vector.shape_cast %32 : vector<1x1x8x64xf32> to vector<8x64xf32>
    %34 = vector.extract_strided_slice %4 {offsets = [3, 0, 0], sizes = [1, 1, 64], strides = [1, 1, 1]} : vector<7x1x64xf32> to vector<1x1x64xf32>
    %35 = vector.shape_cast %34 : vector<1x1x64xf32> to vector<1x64xf32>
    %36 = vector.broadcast %35 : vector<1x64xf32> to vector<8x64xf32>
    %37 = arith.mulf %33, %36 : vector<8x64xf32>
    %38 = arith.addf %29, %37 : vector<8x64xf32>
    %c4_i32 = arith.constant 4 : i32
    %39 = arith.addi %3, %c4_i32 : i32
    %c0_16 = arith.constant 0 : index
    %c0_17 = arith.constant 0 : index
    %40 = arith.index_cast %39 : i32 to index
    %c0_18 = arith.constant 0 : index
    %41 = vector.load %arg2[%c0_16, %c0_17, %40, %c0_18] : memref<1x1x14x64xf32, #tpu.memory_space<vmem>>, vector<1x1x8x64xf32>
    %42 = vector.shape_cast %41 : vector<1x1x8x64xf32> to vector<8x64xf32>
    %43 = vector.extract_strided_slice %4 {offsets = [4, 0, 0], sizes = [1, 1, 64], strides = [1, 1, 1]} : vector<7x1x64xf32> to vector<1x1x64xf32>
    %44 = vector.shape_cast %43 : vector<1x1x64xf32> to vector<1x64xf32>
    %45 = vector.broadcast %44 : vector<1x64xf32> to vector<8x64xf32>
    %46 = arith.mulf %42, %45 : vector<8x64xf32>
    %47 = arith.addf %38, %46 : vector<8x64xf32>
    %c5_i32 = arith.constant 5 : i32
    %48 = arith.addi %3, %c5_i32 : i32
    %c0_19 = arith.constant 0 : index
    %c0_20 = arith.constant 0 : index
    %49 = arith.index_cast %48 : i32 to index
    %c0_21 = arith.constant 0 : index
    %50 = vector.load %arg2[%c0_19, %c0_20, %49, %c0_21] : memref<1x1x14x64xf32, #tpu.memory_space<vmem>>, vector<1x1x8x64xf32>
    %51 = vector.shape_cast %50 : vector<1x1x8x64xf32> to vector<8x64xf32>
    %52 = vector.extract_strided_slice %4 {offsets = [5, 0, 0], sizes = [1, 1, 64], strides = [1, 1, 1]} : vector<7x1x64xf32> to vector<1x1x64xf32>
    %53 = vector.shape_cast %52 : vector<1x1x64xf32> to vector<1x64xf32>
    %54 = vector.broadcast %53 : vector<1x64xf32> to vector<8x64xf32>
    %55 = arith.mulf %51, %54 : vector<8x64xf32>
    %56 = arith.addf %47, %55 : vector<8x64xf32>
    %c6_i32 = arith.constant 6 : i32
    %57 = arith.addi %3, %c6_i32 : i32
    %c0_22 = arith.constant 0 : index
    %c0_23 = arith.constant 0 : index
    %58 = arith.index_cast %57 : i32 to index
    %c0_24 = arith.constant 0 : index
    %59 = vector.load %arg2[%c0_22, %c0_23, %58, %c0_24] : memref<1x1x14x64xf32, #tpu.memory_space<vmem>>, vector<1x1x8x64xf32>
    %60 = vector.shape_cast %59 : vector<1x1x8x64xf32> to vector<8x64xf32>
    %61 = vector.extract_strided_slice %4 {offsets = [6, 0, 0], sizes = [1, 1, 64], strides = [1, 1, 1]} : vector<7x1x64xf32> to vector<1x1x64xf32>
    %62 = vector.shape_cast %61 : vector<1x1x64xf32> to vector<1x64xf32>
    %63 = vector.broadcast %62 : vector<1x64xf32> to vector<8x64xf32>
    %64 = arith.mulf %60, %63 : vector<8x64xf32>
    %65 = arith.addf %56, %64 : vector<8x64xf32>
    %c6_i32_25 = arith.constant 6 : i32
    %66 = arith.addi %3, %c6_i32_25 : i32
    %c0_26 = arith.constant 0 : index
    %c0_27 = arith.constant 0 : index
    %67 = arith.index_cast %66 : i32 to index
    %c0_28 = arith.constant 0 : index
    %68 = vector.load %arg2[%c0_26, %c0_27, %67, %c0_28] : memref<1x1x14x64xf32, #tpu.memory_space<vmem>>, vector<1x1x8x64xf32>
    %69 = vector.shape_cast %68 : vector<1x1x8x64xf32> to vector<8x64xf32>
    %c0_29 = arith.constant 0 : index
    %c0_30 = arith.constant 0 : index
    %70 = vector.load %arg4[%c0_29, %c0_30] : memref<64x128xf32, #tpu.memory_space<vmem>>, vector<64x128xf32>
    %cst = arith.constant dense<0.000000e+00> : vector<8x128xf32>
    %71 = tpu.matmul %65, %70, %cst {dimension_numbers = #tpu.dot_dimension_numbers<[1], [0], [0], [1], [0, 0, 1, 1], [], []>, precision = #tpu.contract_precision<fp32>} : vector<8x64xf32>, vector<64x128xf32>, vector<8x128xf32> -> vector<8x128xf32>
    %c0_31 = arith.constant 0 : index
    %c0_32 = arith.constant 0 : index
    %72 = vector.load %arg5[%c0_31, %c0_32] : memref<1x128xf32, #tpu.memory_space<vmem>>, vector<1x128xf32>
    %73 = vector.broadcast %72 : vector<1x128xf32> to vector<8x128xf32>
    %74 = arith.addf %71, %73 : vector<8x128xf32>
    %cst_33 = arith.constant 5.000000e-01 : f32
    %75 = vector.broadcast %cst_33 : f32 to vector<8x128xf32>
    %76 = arith.mulf %75, %74 : vector<8x128xf32>
    %cst_34 = arith.constant 2.000000e+00 : f32
    %77 = math.sqrt %cst_34 : f32
    %cst_35 = arith.constant 1.000000e+00 : f32
    %78 = arith.divf %cst_35, %77 : f32
    %79 = vector.broadcast %78 : f32 to vector<8x128xf32>
    %80 = arith.mulf %74, %79 : vector<8x128xf32>
    %81 = math.erf %80 : vector<8x128xf32>
    %cst_36 = arith.constant 1.000000e+00 : f32
    %82 = vector.broadcast %cst_36 : f32 to vector<8x128xf32>
    %83 = arith.addf %82, %81 : vector<8x128xf32>
    %84 = arith.mulf %76, %83 : vector<8x128xf32>
    %c0_37 = arith.constant 0 : index
    %c0_38 = arith.constant 0 : index
    %85 = vector.load %arg6[%c0_37, %c0_38] : memref<1x128xf32, #tpu.memory_space<vmem>>, vector<1x128xf32>
    %86 = vector.broadcast %85 : vector<1x128xf32> to vector<8x128xf32>
    %87 = arith.mulf %84, %86 : vector<8x128xf32>
    %c0_39 = arith.constant 0 : index
    %c0_40 = arith.constant 0 : index
    %88 = vector.load %arg7[%c0_39, %c0_40] : memref<1x128xf32, #tpu.memory_space<vmem>>, vector<1x128xf32>
    %89 = vector.broadcast %88 : vector<1x128xf32> to vector<8x128xf32>
    %90 = arith.addf %87, %89 : vector<8x128xf32>
    %c0_41 = arith.constant 0 : index
    %c0_42 = arith.constant 0 : index
    %91 = vector.load %arg8[%c0_41, %c0_42] : memref<64x128xf32, #tpu.memory_space<vmem>>, vector<64x128xf32>
    %cst_43 = arith.constant dense<0.000000e+00> : vector<8x128xf32>
    %92 = tpu.matmul %69, %91, %cst_43 {dimension_numbers = #tpu.dot_dimension_numbers<[1], [0], [0], [1], [0, 0, 1, 1], [], []>, precision = #tpu.contract_precision<fp32>} : vector<8x64xf32>, vector<64x128xf32>, vector<8x128xf32> -> vector<8x128xf32>
    %c0_44 = arith.constant 0 : index
    %c0_45 = arith.constant 0 : index
    %93 = vector.load %arg9[%c0_44, %c0_45] : memref<1x128xf32, #tpu.memory_space<vmem>>, vector<1x128xf32>
    %94 = vector.broadcast %93 : vector<1x128xf32> to vector<8x128xf32>
    %95 = arith.addf %92, %94 : vector<8x128xf32>
    %cst_46 = arith.constant 5.000000e-01 : f32
    %96 = vector.broadcast %cst_46 : f32 to vector<8x128xf32>
    %97 = arith.mulf %96, %95 : vector<8x128xf32>
    %cst_47 = arith.constant 2.000000e+00 : f32
    %98 = math.sqrt %cst_47 : f32
    %cst_48 = arith.constant 1.000000e+00 : f32
    %99 = arith.divf %cst_48, %98 : f32
    %100 = vector.broadcast %99 : f32 to vector<8x128xf32>
    %101 = arith.mulf %95, %100 : vector<8x128xf32>
    %102 = math.erf %101 : vector<8x128xf32>
    %cst_49 = arith.constant 1.000000e+00 : f32
    %103 = vector.broadcast %cst_49 : f32 to vector<8x128xf32>
    %104 = arith.addf %103, %102 : vector<8x128xf32>
    %105 = arith.mulf %97, %104 : vector<8x128xf32>
    %c0_50 = arith.constant 0 : index
    %c0_51 = arith.constant 0 : index
    %106 = vector.load %arg10[%c0_50, %c0_51] : memref<1x128xf32, #tpu.memory_space<vmem>>, vector<1x128xf32>
    %107 = vector.broadcast %106 : vector<1x128xf32> to vector<8x128xf32>
    %108 = arith.mulf %105, %107 : vector<8x128xf32>
    %c0_52 = arith.constant 0 : index
    %c0_53 = arith.constant 0 : index
    %109 = vector.load %arg11[%c0_52, %c0_53] : memref<1x128xf32, #tpu.memory_space<vmem>>, vector<1x128xf32>
    %110 = vector.broadcast %109 : vector<1x128xf32> to vector<8x128xf32>
    %111 = arith.addf %108, %110 : vector<8x128xf32>
    %112 = arith.addf %90, %111 : vector<8x128xf32>
    %c0_54 = arith.constant 0 : index
    %113 = arith.index_cast %3 : i32 to index
    %c0_55 = arith.constant 0 : index
    %114 = vector.load %arg12[%c0_54, %113, %c0_55] : memref<1x8x128xf32, #tpu.memory_space<vmem>>, vector<1x8x128xf32>
    %115 = vector.shape_cast %114 : vector<1x8x128xf32> to vector<8x128xf32>
    %116 = vector.shape_cast %112 : vector<8x128xf32> to vector<1x8x128xf32>
    tpu.vector_store %arg12[%c0_54, %113, %c0_55], %116 {strides = array<i32>} : memref<1x8x128xf32, #tpu.memory_space<vmem>>, vector<1x8x128xf32>,
    %c1_i32_56 = arith.constant 1 : i32
    return
  }
  func.func @transform_0(%arg0: i32, %arg1: i32) -> (i32, i32, i32, i32) {
    %c0_i32 = arith.constant 0 : i32
    %c0_i32_0 = arith.constant 0 : i32
    %c0_i32_1 = arith.constant 0 : i32
    return %arg0, %arg1, %c0_i32, %c0_i32_0 : i32, i32, i32, i32
  }
  func.func @transform_1(%arg0: i32, %arg1: i32) -> (i32, i32, i32) {
    %c0_i32 = arith.constant 0 : i32
    %c0_i32_0 = arith.constant 0 : i32
    %c0_i32_1 = arith.constant 0 : i32
    %c0_i32_2 = arith.constant 0 : i32
    return %c0_i32, %c0_i32_0, %c0_i32_1 : i32, i32, i32
  }
  func.func @transform_2(%arg0: i32, %arg1: i32) -> (i32, i32) {
    %c0_i32 = arith.constant 0 : i32
    %c0_i32_0 = arith.constant 0 : i32
    %c0_i32_1 = arith.constant 0 : i32
    return %c0_i32, %c0_i32_0 : i32, i32
  }
  func.func @transform_3(%arg0: i32, %arg1: i32) -> (i32, i32) {
    %c0_i32 = arith.constant 0 : i32
    %c0_i32_0 = arith.constant 0 : i32
    %c0_i32_1 = arith.constant 0 : i32
    return %c0_i32, %c0_i32_0 : i32, i32
  }
  func.func @transform_4(%arg0: i32, %arg1: i32) -> (i32, i32) {
    %c0_i32 = arith.constant 0 : i32
    %c0_i32_0 = arith.constant 0 : i32
    %c0_i32_1 = arith.constant 0 : i32
    return %c0_i32, %c0_i32_0 : i32, i32
  }
  func.func @transform_5(%arg0: i32, %arg1: i32) -> (i32, i32) {
    %c0_i32 = arith.constant 0 : i32
    %c0_i32_0 = arith.constant 0 : i32
    %c0_i32_1 = arith.constant 0 : i32
    return %c0_i32, %c0_i32_0 : i32, i32
  }
  func.func @transform_6(%arg0: i32, %arg1: i32) -> (i32, i32) {
    %c0_i32 = arith.constant 0 : i32
    %c0_i32_0 = arith.constant 0 : i32
    %c0_i32_1 = arith.constant 0 : i32
    return %c0_i32, %c0_i32_0 : i32, i32
  }
  func.func @transform_7(%arg0: i32, %arg1: i32) -> (i32, i32) {
    %c0_i32 = arith.constant 0 : i32
    %c0_i32_0 = arith.constant 0 : i32
    %c0_i32_1 = arith.constant 0 : i32
    return %c0_i32, %c0_i32_0 : i32, i32
  }
  func.func @transform_8(%arg0: i32, %arg1: i32) -> (i32, i32) {
    %c0_i32 = arith.constant 0 : i32
    %c0_i32_0 = arith.constant 0 : i32
    %c0_i32_1 = arith.constant 0 : i32
    return %c0_i32, %c0_i32_0 : i32, i32
  }
  func.func @transform_9(%arg0: i32, %arg1: i32) -> (i32, i32) {
    %c0_i32 = arith.constant 0 : i32
    %c0_i32_0 = arith.constant 0 : i32
    %c0_i32_1 = arith.constant 0 : i32
    return %c0_i32, %c0_i32_0 : i32, i32
  }
  func.func @transform_10(%arg0: i32, %arg1: i32) -> (i32, i32, i32) {
    %c0_i32 = arith.constant 0 : i32
    %c0_i32_0 = arith.constant 0 : i32
    return %arg0, %arg1, %c0_i32 : i32, i32, i32
  }
}

</mosaic_0001>

<llo_original>
// kernel: tpu_custom_call.1
$region0: #{tpu_custom_call.1}
  #allocation0 [shape = 'u32[]', space=smem, size = 0x4, offset = 0x4, fixed_abs, tag = 'smem constant byte address 0x4 - core index']
  #allocation1 [shape = 'u32[72,128]{1,0:T(1,128)}', space=vmem, size = 0x9000, scoped, tag = 'internal scratch']
  %s0 = inlined_call_operand.vmem [shape: f32[2,2,14,64], index: 0, kind: input, shape index: {}]
  %s1 = inlined_call_operand.vmem [shape: f32[7,1,64], index: 1, kind: input, shape index: {}]
  %s2 = inlined_call_operand.vmem [shape: f32[64,128], index: 2, kind: input, shape index: {}]
  %s3 = inlined_call_operand.vmem [shape: f32[1,128], index: 3, kind: input, shape index: {}]
  %s4 = inlined_call_operand.vmem [shape: f32[1,128], index: 4, kind: input, shape index: {}]
  %s5 = inlined_call_operand.vmem [shape: f32[1,128], index: 5, kind: input, shape index: {}]
  %s6 = inlined_call_operand.hbm [shape: f32[64,128], index: 6, kind: input, shape index: {}]
  %s7 = inlined_call_operand.vmem [shape: f32[1,128], index: 7, kind: input, shape index: {}]
  %s8 = inlined_call_operand.vmem [shape: f32[1,128], index: 8, kind: input, shape index: {}]
  %s9 = inlined_call_operand.vmem [shape: f32[1,128], index: 9, kind: input, shape index: {}]
  %s10 = inlined_call_operand.hbm [shape: f32[2,16,128], index: 10, kind: output, shape index: {}]
  %s11 = sld [smem:[#allocation0]]
  $region77: #{tpu_custom_call.1} parent=0
    _
  %s13 = ssub.s32 1, %s11
  %s14 = scalar_select 0, %s13, %s11
  $region1: #{tpu_custom_call.1} parent=0
    #allocation2 [shape = 'u8[32768]{0}', space=vmem, size = 0x8000, scoped, tag = 'input window, operand 6, single buffered']
    #allocation3 [shape = 's32[2]{0}', space=sflag, size = 0x8, scoped, tag = 'scoped memory for tpu_custom_call.1']
    #allocation4 [shape = 's32[2]{0}', space=sflag, size = 0x8, scoped, tag = 'scoped memory for tpu_custom_call.1']
    #allocation5 [shape = 'u8[8192]{0}', space=vmem, size = 0x2000, scoped, tag = 'output window, operand 0']
    %15 = vsyncpa [#allocation3], 0
    %16 = vsyncpa [#allocation4], 0
    %s17 = scalar_lea.sflag [#allocation4], 1
    %18 = vsyncpa %s17, 0
    loop: start=0, step=1, limit=6
    $region2: #{tpu_custom_call.1} parent=1 // loop_pre_header
      _
    $region3: #{tpu_custom_call.1} parent=1 // loop_header
      %s20 = sphi 0, %s24
      %p21 = scmp.ge.s32.totalorder %s20, 6
      %s27 = sphi 0, %s39
      %s28 = sphi 0, %s35
      %s29 = sphi 0, %s27
      %s30 = sphi 0, %s28
      %s31 = sphi 0, %s29
      %s32 = sphi 0, %s30
      %s44 = sphi 0, %s46
      %s47 = sphi 0, %s44
      %s48 = sphi 0, %s47
      %s64 = sphi 0, %s48
      %s68 = sphi 0, %s68
      %s70 = sphi 0, %s68
      %s71 = sphi 0, %s70
      %s85 = sphi 0, %s71
      %s89 = sphi 0, %s89
      %s91 = sphi 0, %s89
      %s92 = sphi 0, %s91
      %s106 = sphi 0, %s92
      %s110 = sphi 0, %s110
      %s112 = sphi 0, %s110
      %s113 = sphi 0, %s112
      %s127 = sphi 0, %s113
      %s131 = sphi 0, %s131
      %s133 = sphi 0, %s131
      %s134 = sphi 0, %s133
      %s148 = sphi 0, %s134
      %s152 = sphi 0, %s152
      %s154 = sphi 0, %s152
      %s155 = sphi 0, %s154
      %s169 = sphi 0, %s155
      %s173 = sphi 0, %s173
      %s175 = sphi 0, %s173
      %s176 = sphi 0, %s175
      %s190 = sphi 0, %s176
      %s194 = sphi 0, %s194
      %s196 = sphi 0, %s194
      %s197 = sphi 0, %s196
      %s211 = sphi 0, %s197
      %s215 = sphi 0, %s215
      %s217 = sphi 0, %s215
      %s218 = sphi 0, %s217
      %s232 = sphi 0, %s218
      %s236 = sphi 0, %s236
      %s238 = sphi 0, %s236
      %s239 = sphi 0, %s238
      %s253 = sphi 0, %s239
      %s261 = sphi 0, %s263
      %s264 = sphi 0, %s261
      %s265 = sphi 0, %s264
      %s281 = sphi 0, %s265
    $region4: #{tpu_custom_call.1} parent=1 // loop_header_branch
      %23 = sbr.rel (%p21) target = $region8
    $region5: #{tpu_custom_call.1} parent=1 // loop_body
      %s25 = ssub.s32 %s20, 1
      %s26 = ssub.s32 %s20, 2
      %s33 = sadd.s32 1, %s28
      %p34 = scmp.ge.s32.totalorder %s33, 2
      %s35 = scalar_select %p34, 0, %s33
      %s36 = sadd.s32 1, %s27
      %s37 = scalar_select %p34, %s36, %s27
      %p38 = scmp.ge.s32.totalorder %s37, 2
      %s39 = scalar_select %p38, 0, %s37
      %s40 = ssub.s32 %s27, %s39
      %s41 = ssub.s32 %s28, %s35
      %s42 = sor.u32 %s40, %s41
      %p43 = scmp.eq.s32.totalorder %s42, 0
      %s45 = sadd.s32 %s44, 1
      %s46 = scalar_select %p43, %s44, %s45
      %p49 = pneg %p43
      %p50 = scmp.eq.s32.totalorder %s20, 3
      %p51 = por %p49, %p50
      %p52 = scmp.ne.s32.totalorder %s44, %s47
      %p53 = scmp.eq.s32.totalorder %s20, 0
      %p54 = por %p52, %p53
      %p55 = scmp.ne.s32.totalorder %s44, %s47
      %p56 = scmp.eq.s32.totalorder %s25, 3
      %p57 = por %p55, %p56
      %p58 = scmp.ne.s32.totalorder %s47, %s48
      %p59 = scmp.eq.s32.totalorder %s25, 0
      %p60 = por %p58, %p59
      %p61 = scmp.ne.s32.totalorder %s47, %s48
      %p62 = scmp.eq.s32.totalorder %s26, 3
      %p63 = por %p61, %p62
      %p65 = scmp.ne.s32.totalorder %s48, %s64
      %p66 = scmp.eq.s32.totalorder %s26, 0
      %p67 = por %p65, %p66
      %s69 = sadd.s32 %s68, 1
      %p72 = scmp.eq.s32.totalorder %s20, 3
      %p73 = scmp.ne.s32.totalorder %s68, %s70
      %p74 = scmp.eq.s32.totalorder %s20, 0
      %p75 = por %p73, %p74
      %p76 = scmp.ne.s32.totalorder %s68, %s70
      %p77 = scmp.eq.s32.totalorder %s25, 3
      %p78 = por %p76, %p77
      %p79 = scmp.ne.s32.totalorder %s70, %s71
      %p80 = scmp.eq.s32.totalorder %s25, 0
      %p81 = por %p79, %p80
      %p82 = scmp.ne.s32.totalorder %s70, %s71
      %p83 = scmp.eq.s32.totalorder %s26, 3
      %p84 = por %p82, %p83
      %p86 = scmp.ne.s32.totalorder %s71, %s85
      %p87 = scmp.eq.s32.totalorder %s26, 0
      %p88 = por %p86, %p87
      %s90 = sadd.s32 %s89, 1
      %p93 = scmp.eq.s32.totalorder %s20, 3
      %p94 = scmp.ne.s32.totalorder %s89, %s91
      %p95 = scmp.eq.s32.totalorder %s20, 0
      %p96 = por %p94, %p95
      %p97 = scmp.ne.s32.totalorder %s89, %s91
      %p98 = scmp.eq.s32.totalorder %s25, 3
      %p99 = por %p97, %p98
      %p100 = scmp.ne.s32.totalorder %s91, %s92
      %p101 = scmp.eq.s32.totalorder %s25, 0
      %p102 = por %p100, %p101
      %p103 = scmp.ne.s32.totalorder %s91, %s92
      %p104 = scmp.eq.s32.totalorder %s26, 3
      %p105 = por %p103, %p104
      %p107 = scmp.ne.s32.totalorder %s92, %s106
      %p108 = scmp.eq.s32.totalorder %s26, 0
      %p109 = por %p107, %p108
      %s111 = sadd.s32 %s110, 1
      %p114 = scmp.eq.s32.totalorder %s20, 3
      %p115 = scmp.ne.s32.totalorder %s110, %s112
      %p116 = scmp.eq.s32.totalorder %s20, 0
      %p117 = por %p115, %p116
      %p118 = scmp.ne.s32.totalorder %s110, %s112
      %p119 = scmp.eq.s32.totalorder %s25, 3
      %p120 = por %p118, %p119
      %p121 = scmp.ne.s32.totalorder %s112, %s113
      %p122 = scmp.eq.s32.totalorder %s25, 0
      %p123 = por %p121, %p122
      %p124 = scmp.ne.s32.totalorder %s112, %s113
      %p125 = scmp.eq.s32.totalorder %s26, 3
      %p126 = por %p124, %p125
      %p128 = scmp.ne.s32.totalorder %s113, %s127
      %p129 = scmp.eq.s32.totalorder %s26, 0
      %p130 = por %p128, %p129
      %s132 = sadd.s32 %s131, 1
      %p135 = scmp.eq.s32.totalorder %s20, 3
      %p136 = scmp.ne.s32.totalorder %s131, %s133
      %p137 = scmp.eq.s32.totalorder %s20, 0
      %p138 = por %p136, %p137
      %p139 = scmp.ne.s32.totalorder %s131, %s133
      %p140 = scmp.eq.s32.totalorder %s25, 3
      %p141 = por %p139, %p140
      %p142 = scmp.ne.s32.totalorder %s133, %s134
      %p143 = scmp.eq.s32.totalorder %s25, 0
      %p144 = por %p142, %p143
      %p145 = scmp.ne.s32.totalorder %s133, %s134
      %p146 = scmp.eq.s32.totalorder %s26, 3
      %p147 = por %p145, %p146
      %p149 = scmp.ne.s32.totalorder %s134, %s148
      %p150 = scmp.eq.s32.totalorder %s26, 0
      %p151 = por %p149, %p150
      %s153 = sadd.s32 %s152, 1
      %p156 = scmp.eq.s32.totalorder %s20, 3
      %p157 = scmp.ne.s32.totalorder %s152, %s154
      %p158 = scmp.eq.s32.totalorder %s20, 0
      %p159 = por %p157, %p158
      %p160 = scmp.ne.s32.totalorder %s152, %s154
      %p161 = scmp.eq.s32.totalorder %s25, 3
      %p162 = por %p160, %p161
      %p163 = scmp.ne.s32.totalorder %s154, %s155
      %p164 = scmp.eq.s32.totalorder %s25, 0
      %p165 = por %p163, %p164
      %p166 = scmp.ne.s32.totalorder %s154, %s155
      %p167 = scmp.eq.s32.totalorder %s26, 3
      %p168 = por %p166, %p167
      %p170 = scmp.ne.s32.totalorder %s155, %s169
      %p171 = scmp.eq.s32.totalorder %s26, 0
      %p172 = por %p170, %p171
      %s174 = sadd.s32 %s173, 1
      %p177 = scmp.eq.s32.totalorder %s20, 3
      %p178 = scmp.ne.s32.totalorder %s173, %s175
      %p179 = scmp.eq.s32.totalorder %s20, 0
      %p180 = por %p178, %p179
      %p181 = scmp.ne.s32.totalorder %s173, %s175
      %p182 = scmp.eq.s32.totalorder %s25, 3
      %p183 = por %p181, %p182
      %p184 = scmp.ne.s32.totalorder %s175, %s176
      %p185 = scmp.eq.s32.totalorder %s25, 0
      %p186 = por %p184, %p185
      %p187 = scmp.ne.s32.totalorder %s175, %s176
      %p188 = scmp.eq.s32.totalorder %s26, 3
      %p189 = por %p187, %p188
      %p191 = scmp.ne.s32.totalorder %s176, %s190
      %p192 = scmp.eq.s32.totalorder %s26, 0
      %p193 = por %p191, %p192
      %s195 = sadd.s32 %s194, 1
      %p198 = scmp.eq.s32.totalorder %s20, 3
      %p199 = scmp.ne.s32.totalorder %s194, %s196
      %p200 = scmp.eq.s32.totalorder %s20, 0
      %p201 = por %p199, %p200
      %p202 = scmp.ne.s32.totalorder %s194, %s196
      %p203 = scmp.eq.s32.totalorder %s25, 3
      %p204 = por %p202, %p203
      %p205 = scmp.ne.s32.totalorder %s196, %s197
      %p206 = scmp.eq.s32.totalorder %s25, 0
      %p207 = por %p205, %p206
      %p208 = scmp.ne.s32.totalorder %s196, %s197
      %p209 = scmp.eq.s32.totalorder %s26, 3
      %p210 = por %p208, %p209
      %p212 = scmp.ne.s32.totalorder %s197, %s211
      %p213 = scmp.eq.s32.totalorder %s26, 0
      %p214 = por %p212, %p213
      %s216 = sadd.s32 %s215, 1
      %p219 = scmp.eq.s32.totalorder %s20, 3
      %p220 = scmp.ne.s32.totalorder %s215, %s217
      %p221 = scmp.eq.s32.totalorder %s20, 0
      %p222 = por %p220, %p221
      %p223 = scmp.ne.s32.totalorder %s215, %s217
      %p224 = scmp.eq.s32.totalorder %s25, 3
      %p225 = por %p223, %p224
      %p226 = scmp.ne.s32.totalorder %s217, %s218
      %p227 = scmp.eq.s32.totalorder %s25, 0
      %p228 = por %p226, %p227
      %p229 = scmp.ne.s32.totalorder %s217, %s218
      %p230 = scmp.eq.s32.totalorder %s26, 3
      %p231 = por %p229, %p230
      %p233 = scmp.ne.s32.totalorder %s218, %s232
      %p234 = scmp.eq.s32.totalorder %s26, 0
      %p235 = por %p233, %p234
      %s237 = sadd.s32 %s236, 1
      %p240 = scmp.eq.s32.totalorder %s20, 3
      %p241 = scmp.ne.s32.totalorder %s236, %s238
      %p242 = scmp.eq.s32.totalorder %s20, 0
      %p243 = por %p241, %p242
      %p244 = scmp.ne.s32.totalorder %s236, %s238
      %p245 = scmp.eq.s32.totalorder %s25, 3
      %p246 = por %p244, %p245
      %p247 = scmp.ne.s32.totalorder %s238, %s239
      %p248 = scmp.eq.s32.totalorder %s25, 0
      %p249 = por %p247, %p248
      %p250 = scmp.ne.s32.totalorder %s238, %s239
      %p251 = scmp.eq.s32.totalorder %s26, 3
      %p252 = por %p250, %p251
      %p254 = scmp.ne.s32.totalorder %s239, %s253
      %p255 = scmp.eq.s32.totalorder %s26, 0
      %p256 = por %p254, %p255
      %s257 = ssub.s32 %s27, %s39
      %s258 = ssub.s32 %s28, %s35
      %s259 = sor.u32 %s257, %s258
      %p260 = scmp.eq.s32.totalorder %s259, 0
      %s262 = sadd.s32 %s261, 1
      %s263 = scalar_select %p260, %s261, %s262
      %p266 = pneg %p260
      %p267 = scmp.eq.s32.totalorder %s20, 3
      %p268 = por %p266, %p267
      %p269 = scmp.ne.s32.totalorder %s261, %s264
      %p270 = scmp.eq.s32.totalorder %s20, 0
      %p271 = por %p269, %p270
      %p272 = scmp.ne.s32.totalorder %s261, %s264
      %p273 = scmp.eq.s32.totalorder %s25, 3
      %p274 = por %p272, %p273
      %p275 = scmp.ne.s32.totalorder %s264, %s265
      %p276 = scmp.eq.s32.totalorder %s25, 0
      %p277 = por %p275, %p276
      %p278 = scmp.ne.s32.totalorder %s264, %s265
      %p279 = scmp.eq.s32.totalorder %s26, 3
      %p280 = por %p278, %p279
      %p282 = scmp.ne.s32.totalorder %s265, %s281
      %p283 = scmp.eq.s32.totalorder %s26, 0
      %p284 = por %p282, %p283
      %p285 = scmp.le.s32.totalorder 1, %s20
      %p286 = scmp.lt.s32.totalorder %s20, 5
      %p287 = pnand %p285, %p286
      %p288 = pneg %p287
      // Predicated region
      $region9: #{tpu_custom_call.1} parent=5 // pred_check
        _
      $region10: #{tpu_custom_call.1} parent=5 // pred_check_branch
        %290 = sbr.rel (%p287) target = $region12
      $region11: #{tpu_custom_call.1} parent=5 // pred_region
        %s291 = ssub.s32 %s20, 1
        // Predicated region
        $region13: #{tpu_custom_call.1} parent=11 // pred_check
          %p292 = pneg %p81
        $region14: #{tpu_custom_call.1} parent=11 // pred_check_branch
          %294 = sbr.rel (%p292) target = $region16
        $region15: #{tpu_custom_call.1} parent=11 // pred_region
          _
        $region16: #{tpu_custom_call.1} parent=11 // pred_fallthru
          _
        // Predicated region
        $region17: #{tpu_custom_call.1} parent=11 // pred_check
          %p295 = pneg %p102
        $region18: #{tpu_custom_call.1} parent=11 // pred_check_branch
          %297 = sbr.rel (%p295) target = $region20
        $region19: #{tpu_custom_call.1} parent=11 // pred_region
          _
        $region20: #{tpu_custom_call.1} parent=11 // pred_fallthru
          _
        // Predicated region
        $region21: #{tpu_custom_call.1} parent=11 // pred_check
          %p298 = pneg %p123
        $region22: #{tpu_custom_call.1} parent=11 // pred_check_branch
          %300 = sbr.rel (%p298) target = $region24
        $region23: #{tpu_custom_call.1} parent=11 // pred_region
          _
        $region24: #{tpu_custom_call.1} parent=11 // pred_fallthru
          _
        // Predicated region
        $region25: #{tpu_custom_call.1} parent=11 // pred_check
          %p301 = pneg %p144
        $region26: #{tpu_custom_call.1} parent=11 // pred_check_branch
          %303 = sbr.rel (%p301) target = $region28
        $region27: #{tpu_custom_call.1} parent=11 // pred_region
          _
        $region28: #{tpu_custom_call.1} parent=11 // pred_fallthru
          _
        // Predicated region
        $region29: #{tpu_custom_call.1} parent=11 // pred_check
          %p304 = pneg %p165
        $region30: #{tpu_custom_call.1} parent=11 // pred_check_branch
          %306 = sbr.rel (%p304) target = $region32
        $region31: #{tpu_custom_call.1} parent=11 // pred_region
          _
        $region32: #{tpu_custom_call.1} parent=11 // pred_fallthru
          _
        // Predicated region
        $region33: #{tpu_custom_call.1} parent=11 // pred_check
          %p307 = pneg %p186
        $region34: #{tpu_custom_call.1} parent=11 // pred_check_branch
          %309 = sbr.rel (%p307) target = $region36
        $region35: #{tpu_custom_call.1} parent=11 // pred_region
          %311 = vsyncadd [#allocation3], 0
          %s312 = sshll.u32 %s6, 4
          %s313 = int_to_ptr.hbm [resolvable:$true] %s312
          %s314 = sshll.u32 [#allocation2], 4
          %s315 = int_to_ptr.vmem [resolvable:$true] %s314
          %320 = dma.hbm_to_vmem [thread:$0]  %s313, 1024, %s315, [#allocation3], 128, 128, 8
        $region36: #{tpu_custom_call.1} parent=11 // pred_fallthru
          _
        // Predicated region
        $region37: #{tpu_custom_call.1} parent=11 // pred_check
          %p321 = pneg %p207
        $region38: #{tpu_custom_call.1} parent=11 // pred_check_branch
          %323 = sbr.rel (%p321) target = $region40
        $region39: #{tpu_custom_call.1} parent=11 // pred_region
          _
        $region40: #{tpu_custom_call.1} parent=11 // pred_fallthru
          _
        // Predicated region
        $region41: #{tpu_custom_call.1} parent=11 // pred_check
          %p324 = pneg %p228
        $region42: #{tpu_custom_call.1} parent=11 // pred_check_branch
          %326 = sbr.rel (%p324) target = $region44
        $region43: #{tpu_custom_call.1} parent=11 // pred_region
          _
        $region44: #{tpu_custom_call.1} parent=11 // pred_fallthru
          _
        // Predicated region
        $region45: #{tpu_custom_call.1} parent=11 // pred_check
          %p327 = pneg %p249
        $region46: #{tpu_custom_call.1} parent=11 // pred_check_branch
          %329 = sbr.rel (%p327) target = $region48
        $region47: #{tpu_custom_call.1} parent=11 // pred_region
          _
        $region48: #{tpu_custom_call.1} parent=11 // pred_fallthru
          _
      $region12: #{tpu_custom_call.1} parent=5 // pred_fallthru
        _
      %p330 = scmp.lt.s32.totalorder %s20, 4
      // Predicated region
      $region49: #{tpu_custom_call.1} parent=5 // pred_check
        %p331 = pneg %p330
      $region50: #{tpu_custom_call.1} parent=5 // pred_check_branch
        %333 = sbr.rel (%p331) target = $region52
      $region51: #{tpu_custom_call.1} parent=5 // pred_region
        // Predicated region
        $region53: #{tpu_custom_call.1} parent=51 // pred_check
          %p334 = pneg %p54
        $region54: #{tpu_custom_call.1} parent=51 // pred_check_branch
          %336 = sbr.rel (%p334) target = $region56
        $region55: #{tpu_custom_call.1} parent=51 // pred_region
          %p337 = scmp.lt.s32.totalorder %s27, 1
          %s338 = scalar_select %p337, %s27, 1
          %p339 = scmp.lt.s32.totalorder %s28, 1
          %s340 = scalar_select %p339, %s28, 1
          %s341 = smul.addr %s340, 2
          %s342 = smul.addr %s338, 4
          %s343 = sadd.s32 %s341, %s342
          %s344 = smul.addr %s343, 8
          %s345 = scalar_lea.vmem %s0, %s344
        $region56: #{tpu_custom_call.1} parent=51 // pred_fallthru
          _
      $region52: #{tpu_custom_call.1} parent=5 // pred_fallthru
        _
      %p346 = scmp.le.s32.totalorder 1, %s20
      %p347 = scmp.lt.s32.totalorder %s20, 5
      %p348 = pnand %p346, %p347
      %p349 = pneg %p348
      // Predicated region
      $region57: #{tpu_custom_call.1} parent=5 // pred_check
        _
      $region58: #{tpu_custom_call.1} parent=5 // pred_check_branch
        %351 = sbr.rel (%p348) target = $region60
      $region59: #{tpu_custom_call.1} parent=5 // pred_region
        %s352 = ssub.s32 %s20, 1
        // Predicated region
        $region61: #{tpu_custom_call.1} parent=59 // pred_check
          %p353 = pneg %p186
        $region62: #{tpu_custom_call.1} parent=59 // pred_check_branch
          %355 = sbr.rel (%p353) target = $region64
        $region63: #{tpu_custom_call.1} parent=59 // pred_region
          %357 = dma.done [#allocation3], 1024
        $region64: #{tpu_custom_call.1} parent=59 // pred_fallthru
          _
        %p358 = scmp.lt.s32.totalorder %s29, 1
        %s359 = scalar_select %p358, %s29, 1
        %p360 = scmp.lt.s32.totalorder %s30, 1
        %s361 = scalar_select %p360, %s30, 1
        %s362 = smul.addr %s361, 2
        %s363 = smul.addr %s359, 4
        %s364 = sadd.s32 %s362, %s363
        %s365 = smul.addr %s364, 8
        %s366 = scalar_lea.vmem %s0, %s365
        %p367 = pneg %p60
        %p368 = pneg %p57
        %p369 = pneg %p81
        %p370 = pneg %p78
        %p371 = pneg %p102
        %p372 = pneg %p99
        %p373 = pneg %p123
        %p374 = pneg %p120
        %p375 = pneg %p144
        %p376 = pneg %p141
        %p377 = pneg %p165
        %p378 = pneg %p162
        %p379 = pneg %p186
        %p380 = pneg %p183
        %p381 = pneg %p207
        %p382 = pneg %p204
        %p383 = pneg %p228
        %p384 = pneg %p225
        %p385 = pneg %p249
        %p386 = pneg %p246
        %p387 = pneg %p277
        %p388 = pneg %p274
        %s389 = sand.u32 %s264, 1
        %s390 = scalar_lea.sflag [#allocation4], %s389
        %s391 = sand.u32 %s264, 1
        %s392 = smul.addr %s391, 8
        %s393 = scalar_lea.vmem [#allocation5], %s392
        %p394 = scmp.lt.s32.totalorder %s29, 1
        %s395 = scalar_select %p394, %s29, 1
        %p396 = scmp.lt.s32.totalorder %s30, 1
        %s397 = scalar_select %p396, %s30, 1
        %s398 = smul.addr %s397, 2
        %s399 = smul.addr %s395, 4
        %s400 = sadd.s32 %s398, %s399
        %s401 = smul.addr %s400, 8
        %s402 = scalar_lea.vmem %s0, %s401
        %v403 = vld [vmem:[%s1] sm:$0x1]
        %v404 = vld [vmem:[%s1 + $0x1] sm:$0x1]
        %v405 = vld [vmem:[%s1 + $0x2] sm:$0x1]
        %v406 = vld [vmem:[%s1 + $0x3] sm:$0x1]
        %v407 = vld [vmem:[%s1 + $0x4] sm:$0x1]
        %v408 = vld [vmem:[%s1 + $0x5] sm:$0x1]
        %v409 = vld [vmem:[%s1 + $0x6] sm:$0x1]
        %v410 = vld [vmem:[%s402] sm:$0xff]
        %v412 = vperm.slane %v403, 0
        %v414 = vmul.f32 %v410, %v412
        %s415 = sadd.s32 0, 1
        %s416 = scalar_lea.vmem %s402, %s415
        %v417 = vld [vmem:[%s416] sm:$0xff]
        %v419 = vperm.slane %v404, 0
        %v421 = vmul.f32 %v417, %v419
        %v422 = vadd.f32 %v414, %v421
        %s423 = sadd.s32 0, 2
        %s424 = scalar_lea.vmem %s402, %s423
        %v425 = vld [vmem:[%s424] sm:$0xff]
        %v427 = vperm.slane %v405, 0
        %v429 = vmul.f32 %v425, %v427
        %v430 = vadd.f32 %v422, %v429
        %s431 = sadd.s32 0, 3
        %s432 = scalar_lea.vmem %s402, %s431
        %v433 = vld [vmem:[%s432] sm:$0xff]
        %v435 = vperm.slane %v406, 0
        %v437 = vmul.f32 %v433, %v435
        %v438 = vadd.f32 %v430, %v437
        %s439 = sadd.s32 0, 4
        %s440 = scalar_lea.vmem %s402, %s439
        %v441 = vld [vmem:[%s440] sm:$0xff]
        %v443 = vperm.slane %v407, 0
        %v445 = vmul.f32 %v441, %v443
        %v446 = vadd.f32 %v438, %v445
        %s447 = sadd.s32 0, 5
        %s448 = scalar_lea.vmem %s402, %s447
        %v449 = vld [vmem:[%s448] sm:$0xff]
        %v451 = vperm.slane %v408, 0
        %v453 = vmul.f32 %v449, %v451
        %v454 = vadd.f32 %v446, %v453
        %s455 = sadd.s32 0, 6
        %s456 = scalar_lea.vmem %s402, %s455
        %v457 = vld [vmem:[%s456] sm:$0xff]
        %v459 = vperm.slane %v409, 0
        %v461 = vmul.f32 %v457, %v459
        %v462 = vadd.f32 %v454, %v461
        %v463 = vld [vmem:[%s2] sm:$0xff]
        %v464 = vld [vmem:[%s2 + $0x8] sm:$0xff]
        %v465 = vld [vmem:[%s2 + $0x10] sm:$0xff]
        %v466 = vld [vmem:[%s2 + $0x18] sm:$0xff]
        %v467 = vld [vmem:[%s2 + $0x20] sm:$0xff]
        %v468 = vld [vmem:[%s2 + $0x28] sm:$0xff]
        %v469 = vld [vmem:[%s2 + $0x30] sm:$0xff]
        %v470 = vld [vmem:[%s2 + $0x38] sm:$0xff]
        %v471 = vld [vmem:[%s3] sm:$0x1]
        %v473 = vperm.slane %v471, 0
        %vm475 = vcmask 523264
        %v477 = vsel %vm475, %v462, 0
        %479 = vmatpush.msra.mxu0 0.0
        %480 = vmatpush.msra.mxu0 0.0
        %481 = vmatpush.msra.mxu0 0.0
        %482 = vmatpush.msra.mxu0 0.0
        %483 = vmatpush.msra.mxu0 0.0
        %484 = vmatpush.msra.mxu0 0.0
        %485 = vmatpush.msra.mxu0 0.0
        %486 = vmatpush.msra.mxu0 0.0
        %v487 = vand.u32 %v470, 4294901760
        %488 = vmatpush.msra.mxu0 %v487
        %v489 = vand.u32 %v469, 4294901760
        %490 = vmatpush.msra.mxu0 %v489
        %v491 = vand.u32 %v468, 4294901760
        %492 = vmatpush.msra.mxu0 %v491
        %v493 = vand.u32 %v467, 4294901760
        %494 = vmatpush.msra.mxu0 %v493
        %v495 = vand.u32 %v466, 4294901760
        %496 = vmatpush.msra.mxu0 %v495
        %v497 = vand.u32 %v465, 4294901760
        %498 = vmatpush.msra.mxu0 %v497
        %v499 = vand.u32 %v464, 4294901760
        %500 = vmatpush.msra.mxu0 %v499
        %v501 = vand.u32 %v463, 4294901760
        %502 = vmatpush.msra.mxu0 %v501
        %v503 = vand.u32 %v477, 4294901760
        %v504 = vsub.f32 %v477, %v503
        %v505 = vand.u32 %v504, 4294901760
        %v506 = vsub.f32 %v504, %v505
        %v507 = vand.u32 %v506, 4294901760
        %508 = vmatmul.f32.gmra.mxu0 %v507
        %v509 = vpop.f32.mrf.mxu0
        %v510 = vadd.f32 %v473, %v509
        %511 = vdwg.mxu0
        %512 = vmatpush.msra.mxu0 0.0
        %513 = vmatpush.msra.mxu0 0.0
        %514 = vmatpush.msra.mxu0 0.0
        %515 = vmatpush.msra.mxu0 0.0
        %516 = vmatpush.msra.mxu0 0.0
        %517 = vmatpush.msra.mxu0 0.0
        %518 = vmatpush.msra.mxu0 0.0
        %519 = vmatpush.msra.mxu0 0.0
        %v520 = vand.u32 %v470, 4294901760
        %v521 = vsub.f32 %v470, %v520
        %v522 = vand.u32 %v521, 4294901760
        %v523 = vsub.f32 %v521, %v522
        %v524 = vand.u32 %v523, 4294901760
        %525 = vmatpush.msra.mxu0 %v524
        %v526 = vand.u32 %v469, 4294901760
        %v527 = vsub.f32 %v469, %v526
        %v528 = vand.u32 %v527, 4294901760
        %v529 = vsub.f32 %v527, %v528
        %v530 = vand.u32 %v529, 4294901760
        %531 = vmatpush.msra.mxu0 %v530
        %v532 = vand.u32 %v468, 4294901760
        %v533 = vsub.f32 %v468, %v532
        %v534 = vand.u32 %v533, 4294901760
        %v535 = vsub.f32 %v533, %v534
        %v536 = vand.u32 %v535, 4294901760
        %537 = vmatpush.msra.mxu0 %v536
        %v538 = vand.u32 %v467, 4294901760
        %v539 = vsub.f32 %v467, %v538
        %v540 = vand.u32 %v539, 4294901760
        %v541 = vsub.f32 %v539, %v540
        %v542 = vand.u32 %v541, 4294901760
        %543 = vmatpush.msra.mxu0 %v542
        %v544 = vand.u32 %v466, 4294901760
        %v545 = vsub.f32 %v466, %v544
        %v546 = vand.u32 %v545, 4294901760
        %v547 = vsub.f32 %v545, %v546
        %v548 = vand.u32 %v547, 4294901760
        %549 = vmatpush.msra.mxu0 %v548
        %v550 = vand.u32 %v465, 4294901760
        %v551 = vsub.f32 %v465, %v550
        %v552 = vand.u32 %v551, 4294901760
        %v553 = vsub.f32 %v551, %v552
        %v554 = vand.u32 %v553, 4294901760
        %555 = vmatpush.msra.mxu0 %v554
        %v556 = vand.u32 %v464, 4294901760
        %v557 = vsub.f32 %v464, %v556
        %v558 = vand.u32 %v557, 4294901760
        %v559 = vsub.f32 %v557, %v558
        %v560 = vand.u32 %v559, 4294901760
        %561 = vmatpush.msra.mxu0 %v560
        %v562 = vand.u32 %v463, 4294901760
        %v563 = vsub.f32 %v463, %v562
        %v564 = vand.u32 %v563, 4294901760
        %v565 = vsub.f32 %v563, %v564
        %v566 = vand.u32 %v565, 4294901760
        %567 = vmatpush.msra.mxu0 %v566
        %v568 = vand.u32 %v477, 4294901760
        %569 = vmatmul.f32.gmra.mxu0 %v568
        %v570 = vpop.f32.mrf.mxu0
        %v571 = vadd.f32 %v510, %v570
        %572 = vdwg.mxu0
        %573 = vmatpush.msra.mxu0 0.0
        %574 = vmatpush.msra.mxu0 0.0
        %575 = vmatpush.msra.mxu0 0.0
        %576 = vmatpush.msra.mxu0 0.0
        %577 = vmatpush.msra.mxu0 0.0
        %578 = vmatpush.msra.mxu0 0.0
        %579 = vmatpush.msra.mxu0 0.0
        %580 = vmatpush.msra.mxu0 0.0
        %v581 = vand.u32 %v470, 4294901760
        %v582 = vsub.f32 %v470, %v581
        %583 = vmatpush.msra.mxu0 %v582
        %v584 = vand.u32 %v469, 4294901760
        %v585 = vsub.f32 %v469, %v584
        %586 = vmatpush.msra.mxu0 %v585
        %v587 = vand.u32 %v468, 4294901760
        %v588 = vsub.f32 %v468, %v587
        %589 = vmatpush.msra.mxu0 %v588
        %v590 = vand.u32 %v467, 4294901760
        %v591 = vsub.f32 %v467, %v590
        %592 = vmatpush.msra.mxu0 %v591
        %v593 = vand.u32 %v466, 4294901760
        %v594 = vsub.f32 %v466, %v593
        %595 = vmatpush.msra.mxu0 %v594
        %v596 = vand.u32 %v465, 4294901760
        %v597 = vsub.f32 %v465, %v596
        %598 = vmatpush.msra.mxu0 %v597
        %v599 = vand.u32 %v464, 4294901760
        %v600 = vsub.f32 %v464, %v599
        %601 = vmatpush.msra.mxu0 %v600
        %v602 = vand.u32 %v463, 4294901760
        %v603 = vsub.f32 %v463, %v602
        %604 = vmatpush.msra.mxu0 %v603
        %v605 = vand.u32 %v477, 4294901760
        %v606 = vsub.f32 %v477, %v605
        %607 = vmatmul.f32.gmra.mxu0 %v606
        %v608 = vpop.f32.mrf.mxu0
        %v609 = vadd.f32 %v571, %v608
        %610 = vdwg.mxu0
        %611 = vmatpush.msra.mxu0 0.0
        %612 = vmatpush.msra.mxu0 0.0
        %613 = vmatpush.msra.mxu0 0.0
        %614 = vmatpush.msra.mxu0 0.0
        %615 = vmatpush.msra.mxu0 0.0
        %616 = vmatpush.msra.mxu0 0.0
        %617 = vmatpush.msra.mxu0 0.0
        %618 = vmatpush.msra.mxu0 0.0
        %v619 = vand.u32 %v470, 4294901760
        %620 = vmatpush.msra.mxu0 %v619
        %v621 = vand.u32 %v469, 4294901760
        %622 = vmatpush.msra.mxu0 %v621
        %v623 = vand.u32 %v468, 4294901760
        %624 = vmatpush.msra.mxu0 %v623
        %v625 = vand.u32 %v467, 4294901760
        %626 = vmatpush.msra.mxu0 %v625
        %v627 = vand.u32 %v466, 4294901760
        %628 = vmatpush.msra.mxu0 %v627
        %v629 = vand.u32 %v465, 4294901760
        %630 = vmatpush.msra.mxu0 %v629
        %v631 = vand.u32 %v464, 4294901760
        %632 = vmatpush.msra.mxu0 %v631
        %v633 = vand.u32 %v463, 4294901760
        %634 = vmatpush.msra.mxu0 %v633
        %v635 = vand.u32 %v477, 4294901760
        %v636 = vsub.f32 %v477, %v635
        %v637 = vand.u32 %v636, 4294901760
        %638 = vmatmul.f32.gmra.mxu0 %v637
        %v639 = vpop.f32.mrf.mxu0
        %v640 = vadd.f32 %v609, %v639
        %641 = vdwg.mxu0
        %642 = vmatpush.msra.mxu0 0.0
        %643 = vmatpush.msra.mxu0 0.0
        %644 = vmatpush.msra.mxu0 0.0
        %645 = vmatpush.msra.mxu0 0.0
        %646 = vmatpush.msra.mxu0 0.0
        %647 = vmatpush.msra.mxu0 0.0
        %648 = vmatpush.msra.mxu0 0.0
        %649 = vmatpush.msra.mxu0 0.0
        %v650 = vand.u32 %v470, 4294901760
        %v651 = vsub.f32 %v470, %v650
        %v652 = vand.u32 %v651, 4294901760
        %653 = vmatpush.msra.mxu0 %v652
        %v654 = vand.u32 %v469, 4294901760
        %v655 = vsub.f32 %v469, %v654
        %v656 = vand.u32 %v655, 4294901760
        %657 = vmatpush.msra.mxu0 %v656
        %v658 = vand.u32 %v468, 4294901760
        %v659 = vsub.f32 %v468, %v658
        %v660 = vand.u32 %v659, 4294901760
        %661 = vmatpush.msra.mxu0 %v660
        %v662 = vand.u32 %v467, 4294901760
        %v663 = vsub.f32 %v467, %v662
        %v664 = vand.u32 %v663, 4294901760
        %665 = vmatpush.msra.mxu0 %v664
        %v666 = vand.u32 %v466, 4294901760
        %v667 = vsub.f32 %v466, %v666
        %v668 = vand.u32 %v667, 4294901760
        %669 = vmatpush.msra.mxu0 %v668
        %v670 = vand.u32 %v465, 4294901760
        %v671 = vsub.f32 %v465, %v670
        %v672 = vand.u32 %v671, 4294901760
        %673 = vmatpush.msra.mxu0 %v672
        %v674 = vand.u32 %v464, 4294901760
        %v675 = vsub.f32 %v464, %v674
        %v676 = vand.u32 %v675, 4294901760
        %677 = vmatpush.msra.mxu0 %v676
        %v678 = vand.u32 %v463, 4294901760
        %v679 = vsub.f32 %v463, %v678
        %v680 = vand.u32 %v679, 4294901760
        %681 = vmatpush.msra.mxu0 %v680
        %v682 = vand.u32 %v477, 4294901760
        %683 = vmatmul.f32.gmra.mxu0 %v682
        %v684 = vpop.f32.mrf.mxu0
        %v685 = vadd.f32 %v640, %v684
        %686 = vdwg.mxu0
        %687 = vmatpush.msra.mxu0 0.0
        %688 = vmatpush.msra.mxu0 0.0
        %689 = vmatpush.msra.mxu0 0.0
        %690 = vmatpush.msra.mxu0 0.0
        %691 = vmatpush.msra.mxu0 0.0
        %692 = vmatpush.msra.mxu0 0.0
        %693 = vmatpush.msra.mxu0 0.0
        %694 = vmatpush.msra.mxu0 0.0
        %v695 = vand.u32 %v470, 4294901760
        %696 = vmatpush.msra.mxu0 %v695
        %v697 = vand.u32 %v469, 4294901760
        %698 = vmatpush.msra.mxu0 %v697
        %v699 = vand.u32 %v468, 4294901760
        %700 = vmatpush.msra.mxu0 %v699
        %v701 = vand.u32 %v467, 4294901760
        %702 = vmatpush.msra.mxu0 %v701
        %v703 = vand.u32 %v466, 4294901760
        %704 = vmatpush.msra.mxu0 %v703
        %v705 = vand.u32 %v465, 4294901760
        %706 = vmatpush.msra.mxu0 %v705
        %v707 = vand.u32 %v464, 4294901760
        %708 = vmatpush.msra.mxu0 %v707
        %v709 = vand.u32 %v463, 4294901760
        %710 = vmatpush.msra.mxu0 %v709
        %v711 = vand.u32 %v477, 4294901760
        %712 = vmatmul.f32.gmra.mxu0 %v711
        %v713 = vpop.f32.mrf.mxu0
        %v714 = vadd.f32 %v685, %v713
        %715 = vdwg.mxu0
        %v716 = vmul.f32 %v714, 0.5
        %v717 = vmul.f32 %v714, 0.70710677
        %v718 = vmul.f32 %v717, %v717
        %v719 = vmin.f32 16.0, %v718
        %v720 = vmul.f32 %v719, 2.1237322e-06
        %v721 = vadd.f32 %v720, 0.00028619796
        %v722 = vmul.f32 %v719, %v721
        %v723 = vadd.f32 %v722, 0.0036580483
        %v724 = vmul.f32 %v719, %v723
        %v725 = vadd.f32 %v724, 0.05243302
        %v726 = vmul.f32 %v719, %v725
        %v727 = vadd.f32 %v726, 0.18741608
        %v728 = vmul.f32 %v719, %v727
        %v729 = vadd.f32 %v728, 1.1283791
        %v730 = vmul.f32 %v717, %v729
        %v731 = vmul.f32 %v719, 3.8918573e-05
        %v732 = vadd.f32 %v731, 0.001143296
        %v733 = vmul.f32 %v719, %v732
        %v734 = vadd.f32 %v733, 0.014752088
        %v735 = vmul.f32 %v719, %v734
        %v736 = vadd.f32 %v735, 0.112945676
        %v737 = vmul.f32 %v719, %v736
        %v738 = vadd.f32 %v737, 0.4994258
        %v739 = vmul.f32 %v719, %v738
        %v740 = vadd.f32 %v739, 1.0
        %v741 = vrcp.pop %v740
        %v742 = vmul.f32 %v740, %v741
        %v743 = vsub.f32 1.0, %v742
        %v744 = vmul.f32 %v741, %v743
        %v745 = vadd.f32 %v741, %v744
        %vm746 = vweird.f32 %v740
        %vm747 = vweird.f32 %v741
        %vm748 = vmor %vm746, %vm747
        %v749 = vsel %vm748, %v741, %v745
        %v750 = vand.u32 2147483647, %v740
        %vm751 = vcmp.eq.f32.partialorder %v750, 8.507059e+37
        %v752 = vand.u32 %v740, 2147483648
        %v753 = vor.u32 1.1754944e-38, %v752
        %v754 = vsel %vm751, %v753, %v749
        %v755 = vmul.f32 %v730, %v754
        %v756 = vmin.f32 %v755, 1.0
        %v757 = vmax.f32 %v756, -1.0
        %v758 = vadd.f32 %v757, 1.0
        %v759 = vmul.f32 %v716, %v758
        %v760 = vld [vmem:[%s4] sm:$0x1]
        %v762 = vperm.slane %v760, 0
        %v764 = vmul.f32 %v759, %v762
        %v765 = vld [vmem:[%s5] sm:$0x1]
        %v767 = vperm.slane %v765, 0
        %v769 = vadd.f32 %v764, %v767
        %v770 = vld [vmem:[#allocation2] sm:$0xff]
        %v771 = vld [vmem:[#allocation2 + $0x8] sm:$0xff]
        %v772 = vld [vmem:[#allocation2 + $0x10] sm:$0xff]
        %v773 = vld [vmem:[#allocation2 + $0x18] sm:$0xff]
        %v774 = vld [vmem:[#allocation2 + $0x20] sm:$0xff]
        %v775 = vld [vmem:[#allocation2 + $0x28] sm:$0xff]
        %v776 = vld [vmem:[#allocation2 + $0x30] sm:$0xff]
        %v777 = vld [vmem:[#allocation2 + $0x38] sm:$0xff]
        %v778 = vld [vmem:[%s7] sm:$0x1]
        %v780 = vperm.slane %v778, 0
        %v783 = vsel %vm475, %v457, 0
        %785 = vmatpush.msra.mxu0 0.0
        %786 = vmatpush.msra.mxu0 0.0
        %787 = vmatpush.msra.mxu0 0.0
        %788 = vmatpush.msra.mxu0 0.0
        %789 = vmatpush.msra.mxu0 0.0
        %790 = vmatpush.msra.mxu0 0.0
        %791 = vmatpush.msra.mxu0 0.0
        %792 = vmatpush.msra.mxu0 0.0
        %v793 = vand.u32 %v777, 4294901760
        %794 = vmatpush.msra.mxu0 %v793
        %v795 = vand.u32 %v776, 4294901760
        %796 = vmatpush.msra.mxu0 %v795
        %v797 = vand.u32 %v775, 4294901760
        %798 = vmatpush.msra.mxu0 %v797
        %v799 = vand.u32 %v774, 4294901760
        %800 = vmatpush.msra.mxu0 %v799
        %v801 = vand.u32 %v773, 4294901760
        %802 = vmatpush.msra.mxu0 %v801
        %v803 = vand.u32 %v772, 4294901760
        %804 = vmatpush.msra.mxu0 %v803
        %v805 = vand.u32 %v771, 4294901760
        %806 = vmatpush.msra.mxu0 %v805
        %v807 = vand.u32 %v770, 4294901760
        %808 = vmatpush.msra.mxu0 %v807
        %v809 = vand.u32 %v783, 4294901760
        %v810 = vsub.f32 %v783, %v809
        %v811 = vand.u32 %v810, 4294901760
        %v812 = vsub.f32 %v810, %v811
        %v813 = vand.u32 %v812, 4294901760
        %814 = vmatmul.f32.gmra.mxu0 %v813
        %v815 = vpop.f32.mrf.mxu0
        %v816 = vadd.f32 %v780, %v815
        %817 = vdwg.mxu0
        %818 = vmatpush.msra.mxu0 0.0
        %819 = vmatpush.msra.mxu0 0.0
        %820 = vmatpush.msra.mxu0 0.0
        %821 = vmatpush.msra.mxu0 0.0
        %822 = vmatpush.msra.mxu0 0.0
        %823 = vmatpush.msra.mxu0 0.0
        %824 = vmatpush.msra.mxu0 0.0
        %825 = vmatpush.msra.mxu0 0.0
        %v826 = vand.u32 %v777, 4294901760
        %v827 = vsub.f32 %v777, %v826
        %v828 = vand.u32 %v827, 4294901760
        %v829 = vsub.f32 %v827, %v828
        %v830 = vand.u32 %v829, 4294901760
        %831 = vmatpush.msra.mxu0 %v830
        %v832 = vand.u32 %v776, 4294901760
        %v833 = vsub.f32 %v776, %v832
        %v834 = vand.u32 %v833, 4294901760
        %v835 = vsub.f32 %v833, %v834
        %v836 = vand.u32 %v835, 4294901760
        %837 = vmatpush.msra.mxu0 %v836
        %v838 = vand.u32 %v775, 4294901760
        %v839 = vsub.f32 %v775, %v838
        %v840 = vand.u32 %v839, 4294901760
        %v841 = vsub.f32 %v839, %v840
        %v842 = vand.u32 %v841, 4294901760
        %843 = vmatpush.msra.mxu0 %v842
        %v844 = vand.u32 %v774, 4294901760
        %v845 = vsub.f32 %v774, %v844
        %v846 = vand.u32 %v845, 4294901760
        %v847 = vsub.f32 %v845, %v846
        %v848 = vand.u32 %v847, 4294901760
        %849 = vmatpush.msra.mxu0 %v848
        %v850 = vand.u32 %v773, 4294901760
        %v851 = vsub.f32 %v773, %v850
        %v852 = vand.u32 %v851, 4294901760
        %v853 = vsub.f32 %v851, %v852
        %v854 = vand.u32 %v853, 4294901760
        %855 = vmatpush.msra.mxu0 %v854
        %v856 = vand.u32 %v772, 4294901760
        %v857 = vsub.f32 %v772, %v856
        %v858 = vand.u32 %v857, 4294901760
        %v859 = vsub.f32 %v857, %v858
        %v860 = vand.u32 %v859, 4294901760
        %861 = vmatpush.msra.mxu0 %v860
        %v862 = vand.u32 %v771, 4294901760
        %v863 = vsub.f32 %v771, %v862
        %v864 = vand.u32 %v863, 4294901760
        %v865 = vsub.f32 %v863, %v864
        %v866 = vand.u32 %v865, 4294901760
        %867 = vmatpush.msra.mxu0 %v866
        %v868 = vand.u32 %v770, 4294901760
        %v869 = vsub.f32 %v770, %v868
        %v870 = vand.u32 %v869, 4294901760
        %v871 = vsub.f32 %v869, %v870
        %v872 = vand.u32 %v871, 4294901760
        %873 = vmatpush.msra.mxu0 %v872
        %v874 = vand.u32 %v783, 4294901760
        %875 = vmatmul.f32.gmra.mxu0 %v874
        %v876 = vpop.f32.mrf.mxu0
        %v877 = vadd.f32 %v816, %v876
        %878 = vdwg.mxu0
        %879 = vmatpush.msra.mxu0 0.0
        %880 = vmatpush.msra.mxu0 0.0
        %881 = vmatpush.msra.mxu0 0.0
        %882 = vmatpush.msra.mxu0 0.0
        %883 = vmatpush.msra.mxu0 0.0
        %884 = vmatpush.msra.mxu0 0.0
        %885 = vmatpush.msra.mxu0 0.0
        %886 = vmatpush.msra.mxu0 0.0
        %v887 = vand.u32 %v777, 4294901760
        %v888 = vsub.f32 %v777, %v887
        %889 = vmatpush.msra.mxu0 %v888
        %v890 = vand.u32 %v776, 4294901760
        %v891 = vsub.f32 %v776, %v890
        %892 = vmatpush.msra.mxu0 %v891
        %v893 = vand.u32 %v775, 4294901760
        %v894 = vsub.f32 %v775, %v893
        %895 = vmatpush.msra.mxu0 %v894
        %v896 = vand.u32 %v774, 4294901760
        %v897 = vsub.f32 %v774, %v896
        %898 = vmatpush.msra.mxu0 %v897
        %v899 = vand.u32 %v773, 4294901760
        %v900 = vsub.f32 %v773, %v899
        %901 = vmatpush.msra.mxu0 %v900
        %v902 = vand.u32 %v772, 4294901760
        %v903 = vsub.f32 %v772, %v902
        %904 = vmatpush.msra.mxu0 %v903
        %v905 = vand.u32 %v771, 4294901760
        %v906 = vsub.f32 %v771, %v905
        %907 = vmatpush.msra.mxu0 %v906
        %v908 = vand.u32 %v770, 4294901760
        %v909 = vsub.f32 %v770, %v908
        %910 = vmatpush.msra.mxu0 %v909
        %v911 = vand.u32 %v783, 4294901760
        %v912 = vsub.f32 %v783, %v911
        %913 = vmatmul.f32.gmra.mxu0 %v912
        %v914 = vpop.f32.mrf.mxu0
        %v915 = vadd.f32 %v877, %v914
        %916 = vdwg.mxu0
        %917 = vmatpush.msra.mxu0 0.0
        %918 = vmatpush.msra.mxu0 0.0
        %919 = vmatpush.msra.mxu0 0.0
        %920 = vmatpush.msra.mxu0 0.0
        %921 = vmatpush.msra.mxu0 0.0
        %922 = vmatpush.msra.mxu0 0.0
        %923 = vmatpush.msra.mxu0 0.0
        %924 = vmatpush.msra.mxu0 0.0
        %v925 = vand.u32 %v777, 4294901760
        %926 = vmatpush.msra.mxu0 %v925
        %v927 = vand.u32 %v776, 4294901760
        %928 = vmatpush.msra.mxu0 %v927
        %v929 = vand.u32 %v775, 4294901760
        %930 = vmatpush.msra.mxu0 %v929
        %v931 = vand.u32 %v774, 4294901760
        %932 = vmatpush.msra.mxu0 %v931
        %v933 = vand.u32 %v773, 4294901760
        %934 = vmatpush.msra.mxu0 %v933
        %v935 = vand.u32 %v772, 4294901760
        %936 = vmatpush.msra.mxu0 %v935
        %v937 = vand.u32 %v771, 4294901760
        %938 = vmatpush.msra.mxu0 %v937
        %v939 = vand.u32 %v770, 4294901760
        %940 = vmatpush.msra.mxu0 %v939
        %v941 = vand.u32 %v783, 4294901760
        %v942 = vsub.f32 %v783, %v941
        %v943 = vand.u32 %v942, 4294901760
        %944 = vmatmul.f32.gmra.mxu0 %v943
        %v945 = vpop.f32.mrf.mxu0
        %v946 = vadd.f32 %v915, %v945
        %947 = vdwg.mxu0
        %948 = vmatpush.msra.mxu0 0.0
        %949 = vmatpush.msra.mxu0 0.0
        %950 = vmatpush.msra.mxu0 0.0
        %951 = vmatpush.msra.mxu0 0.0
        %952 = vmatpush.msra.mxu0 0.0
        %953 = vmatpush.msra.mxu0 0.0
        %954 = vmatpush.msra.mxu0 0.0
        %955 = vmatpush.msra.mxu0 0.0
        %v956 = vand.u32 %v777, 4294901760
        %v957 = vsub.f32 %v777, %v956
        %v958 = vand.u32 %v957, 4294901760
        %959 = vmatpush.msra.mxu0 %v958
        %v960 = vand.u32 %v776, 4294901760
        %v961 = vsub.f32 %v776, %v960
        %v962 = vand.u32 %v961, 4294901760
        %963 = vmatpush.msra.mxu0 %v962
        %v964 = vand.u32 %v775, 4294901760
        %v965 = vsub.f32 %v775, %v964
        %v966 = vand.u32 %v965, 4294901760
        %967 = vmatpush.msra.mxu0 %v966
        %v968 = vand.u32 %v774, 4294901760
        %v969 = vsub.f32 %v774, %v968
        %v970 = vand.u32 %v969, 4294901760
        %971 = vmatpush.msra.mxu0 %v970
        %v972 = vand.u32 %v773, 4294901760
        %v973 = vsub.f32 %v773, %v972
        %v974 = vand.u32 %v973, 4294901760
        %975 = vmatpush.msra.mxu0 %v974
        %v976 = vand.u32 %v772, 4294901760
        %v977 = vsub.f32 %v772, %v976
        %v978 = vand.u32 %v977, 4294901760
        %979 = vmatpush.msra.mxu0 %v978
        %v980 = vand.u32 %v771, 4294901760
        %v981 = vsub.f32 %v771, %v980
        %v982 = vand.u32 %v981, 4294901760
        %983 = vmatpush.msra.mxu0 %v982
        %v984 = vand.u32 %v770, 4294901760
        %v985 = vsub.f32 %v770, %v984
        %v986 = vand.u32 %v985, 4294901760
        %987 = vmatpush.msra.mxu0 %v986
        %v988 = vand.u32 %v783, 4294901760
        %989 = vmatmul.f32.gmra.mxu0 %v988
        %v990 = vpop.f32.mrf.mxu0
        %v991 = vadd.f32 %v946, %v990
        %992 = vdwg.mxu0
        %993 = vmatpush.msra.mxu0 0.0
        %994 = vmatpush.msra.mxu0 0.0
        %995 = vmatpush.msra.mxu0 0.0
        %996 = vmatpush.msra.mxu0 0.0
        %997 = vmatpush.msra.mxu0 0.0
        %998 = vmatpush.msra.mxu0 0.0
        %999 = vmatpush.msra.mxu0 0.0
        %1000 = vmatpush.msra.mxu0 0.0
        %v1001 = vand.u32 %v777, 4294901760
        %1002 = vmatpush.msra.mxu0 %v1001
        %v1003 = vand.u32 %v776, 4294901760
        %1004 = vmatpush.msra.mxu0 %v1003
        %v1005 = vand.u32 %v775, 4294901760
        %1006 = vmatpush.msra.mxu0 %v1005
        %v1007 = vand.u32 %v774, 4294901760
        %1008 = vmatpush.msra.mxu0 %v1007
        %v1009 = vand.u32 %v773, 4294901760
        %1010 = vmatpush.msra.mxu0 %v1009
        %v1011 = vand.u32 %v772, 4294901760
        %1012 = vmatpush.msra.mxu0 %v1011
        %v1013 = vand.u32 %v771, 4294901760
        %1014 = vmatpush.msra.mxu0 %v1013
        %v1015 = vand.u32 %v770, 4294901760
        %1016 = vmatpush.msra.mxu0 %v1015
        %v1017 = vand.u32 %v783, 4294901760
        %1018 = vmatmul.f32.gmra.mxu0 %v1017
        %v1019 = vpop.f32.mrf.mxu0
        %v1020 = vadd.f32 %v991, %v1019
        %1021 = vdwg.mxu0
        %v1022 = vmul.f32 %v1020, 0.5
        %v1023 = vmul.f32 %v1020, 0.70710677
        %v1024 = vmul.f32 %v1023, %v1023
        %v1025 = vmin.f32 16.0, %v1024
        %v1026 = vmul.f32 %v1025, 2.1237322e-06
        %v1027 = vadd.f32 %v1026, 0.00028619796
        %v1028 = vmul.f32 %v1025, %v1027
        %v1029 = vadd.f32 %v1028, 0.0036580483
        %v1030 = vmul.f32 %v1025, %v1029
        %v1031 = vadd.f32 %v1030, 0.05243302
        %v1032 = vmul.f32 %v1025, %v1031
        %v1033 = vadd.f32 %v1032, 0.18741608
        %v1034 = vmul.f32 %v1025, %v1033
        %v1035 = vadd.f32 %v1034, 1.1283791
        %v1036 = vmul.f32 %v1023, %v1035
        %v1037 = vmul.f32 %v1025, 3.8918573e-05
        %v1038 = vadd.f32 %v1037, 0.001143296
        %v1039 = vmul.f32 %v1025, %v1038
        %v1040 = vadd.f32 %v1039, 0.014752088
        %v1041 = vmul.f32 %v1025, %v1040
        %v1042 = vadd.f32 %v1041, 0.112945676
        %v1043 = vmul.f32 %v1025, %v1042
        %v1044 = vadd.f32 %v1043, 0.4994258
        %v1045 = vmul.f32 %v1025, %v1044
        %v1046 = vadd.f32 %v1045, 1.0
        %v1047 = vrcp.pop %v1046
        %v1048 = vmul.f32 %v1046, %v1047
        %v1049 = vsub.f32 1.0, %v1048
        %v1050 = vmul.f32 %v1047, %v1049
        %v1051 = vadd.f32 %v1047, %v1050
        %vm1052 = vweird.f32 %v1046
        %vm1053 = vweird.f32 %v1047
        %vm1054 = vmor %vm1052, %vm1053
        %v1055 = vsel %vm1054, %v1047, %v1051
        %v1056 = vand.u32 2147483647, %v1046
        %vm1057 = vcmp.eq.f32.partialorder %v1056, 8.507059e+37
        %v1058 = vand.u32 %v1046, 2147483648
        %v1059 = vor.u32 1.1754944e-38, %v1058
        %v1060 = vsel %vm1057, %v1059, %v1055
        %v1061 = vmul.f32 %v1036, %v1060
        %v1062 = vmin.f32 %v1061, 1.0
        %v1063 = vmax.f32 %v1062, -1.0
        %v1064 = vadd.f32 %v1063, 1.0
        %v1065 = vmul.f32 %v1022, %v1064
        %v1066 = vld [vmem:[%s8] sm:$0x1]
        %v1068 = vperm.slane %v1066, 0
        %v1070 = vmul.f32 %v1065, %v1068
        %v1071 = vld [vmem:[%s9] sm:$0x1]
        %v1073 = vperm.slane %v1071, 0
        %v1075 = vadd.f32 %v1070, %v1073
        %v1076 = vadd.f32 %v769, %v1075
        %1077 = vst [vmem:[%s393] sm:$0xff] %v1076
        %s1078 = sand.u32 %s264, 1
        %s1079 = scalar_lea.sflag [#allocation4], %s1078
        %s1080 = sand.u32 %s264, 1
        %s1081 = smul.addr %s1080, 8
        %s1082 = scalar_lea.vmem [#allocation5], %s1081
        // Predicated region
        $region65: #{tpu_custom_call.1} parent=59 // pred_check
          %p1083 = pneg %p274
        $region66: #{tpu_custom_call.1} parent=59 // pred_check_branch
          %1085 = sbr.rel (%p1083) target = $region68
        $region67: #{tpu_custom_call.1} parent=59 // pred_region
          %1087 = vsyncadd %s1079, 0
          %s1088 = smul.addr %s29, 2
          %s1089 = sadd.s32 %s30, %s1088
          %s1090 = smul.addr %s1089, 8
          %s1091 = scalar_lea.hbm %s10, %s1090
          %s1093 = sshll.u32 %s1082, 4
          %s1094 = int_to_ptr.vmem [resolvable:$true] %s1093
          %s1095 = sshll.u32 %s1091, 4
          %s1096 = int_to_ptr.hbm [resolvable:$true] %s1095
          %1098 = dma.vmem_to_hbm [thread:$0]  %s1094, 128, %s1096, %s1079
        $region68: #{tpu_custom_call.1} parent=59 // pred_fallthru
          _
      $region60: #{tpu_custom_call.1} parent=5 // pred_fallthru
        _
      %p1099 = scmp.le.s32.totalorder 2, %s20
      // Predicated region
      $region69: #{tpu_custom_call.1} parent=5 // pred_check
        %p1100 = pneg %p1099
      $region70: #{tpu_custom_call.1} parent=5 // pred_check_branch
        %1102 = sbr.rel (%p1100) target = $region72
      $region71: #{tpu_custom_call.1} parent=5 // pred_region
        %s1103 = ssub.s32 %s20, 2
        // Predicated region
        $region73: #{tpu_custom_call.1} parent=71 // pred_check
          %p1104 = pneg %p280
        $region74: #{tpu_custom_call.1} parent=71 // pred_check_branch
          %1106 = sbr.rel (%p1104) target = $region76
        $region75: #{tpu_custom_call.1} parent=71 // pred_region
          %s1107 = sand.u32 %s265, 1
          %s1108 = scalar_lea.sflag [#allocation4], %s1107
          %s1109 = sand.u32 %s265, 1
          %s1110 = smul.addr %s1109, 8
          %s1111 = scalar_lea.vmem [#allocation5], %s1110
          %1113 = dma.done %s1108, 128
        $region76: #{tpu_custom_call.1} parent=71 // pred_fallthru
          _
      $region72: #{tpu_custom_call.1} parent=5 // pred_fallthru
        _
    $region6: #{tpu_custom_call.1} parent=1 // loop_footer
      %s24 = sadd.s32 1, %s20
    $region7: #{tpu_custom_call.1} parent=1 // loop_footer_branch
      %19 = sbr.rel target = $region3
    $region8: #{tpu_custom_call.1} parent=1 // loop_exit
      _
    %1114 = vsyncpa [#allocation3], 1
    %s1115 = scalar_lea.sflag [#allocation3], 1
    %1116 = vsyncpa %s1115, 1
    %1117 = vsyncpa [#allocation4], 1
    %s1118 = scalar_lea.sflag [#allocation4], 1
    %1119 = vsyncpa %s1118, 1

</llo_original>
